<compile_context>
chip_gen: v7x
topology: tpu7x:2x2x1
jax: 0.10.0
libtpu: 0.0.40
codegen_flags: <defaults>
</compile_context>

<pallas_src>
import functools

import jax
import jax.numpy as jnp
from jax.experimental import pallas as pl
from jax.experimental.pallas import tpu as pltpu


# -----------------------------------------------------------------------------
# Kernel: one GCN layer,  out[i-block] = act( (sum_k adj[i,k] @ H[k]) @ W + b )
# -----------------------------------------------------------------------------
def _gcn_layer_kernel(adj_ref, h_ref, w_ref, b_ref, out_ref, acc_ref, *, apply_relu):
    k = pl.program_id(1)

    @pl.when(k == 0)
    def _():
        acc_ref[...] = jnp.zeros_like(acc_ref)

    # Neighbour aggregation only in the hot loop: (TM, TK)@(TK, F_in), bf16 MXU, f32 accumulation.
    acc_ref[...] += jnp.dot(adj_ref[...], h_ref[...], preferred_element_type=jnp.float32)

    @pl.when(k == pl.num_programs(1) - 1)
    def _():
        # Weight transform + bias + ReLU hoisted to the epilogue: once per row block.
        res = jnp.dot(acc_ref[...].astype(jnp.bfloat16), w_ref[...],
                      preferred_element_type=jnp.float32)
        res = res + b_ref[...]                     # f32 epilogue
        if apply_relu:
            res = jnp.maximum(res, 0.0)
        # dropout (eval mode) -> identity
        out_ref[...] = res.astype(out_ref.dtype)   # lane-dense (F_out is a multiple of 128)


def _gcn_layer(adj_p, h_p, w_p, b_p, *, apply_relu, out_dtype, tm, tk):
    n_pad = adj_p.shape[0]
    f_in = w_p.shape[0]
    f_out = w_p.shape[1]
    grid = (n_pad // tm, n_pad // tk)

    # Per-step VMEM: double-buffered inputs/outputs + f32 accumulator (+ headroom); keep the cap
    # well below v7x's 64 MiB physical VMEM.
    out_bytes = jnp.dtype(out_dtype).itemsize
    block_bytes = (2 * (tm * tk * 2 + tk * f_in * 2 + f_in * f_out * 2 + f_out * 4)
                   + 2 * tm * f_out * out_bytes
                   + tm * f_in * 4)
    vmem_limit = int(min(56 * 1024 * 1024,
                         max(32 * 1024 * 1024, block_bytes + (4 << 20))))

    kernel = functools.partial(_gcn_layer_kernel, apply_relu=apply_relu)
    return pl.pallas_call(
        kernel,
        out_shape=jax.ShapeDtypeStruct((n_pad, f_out), out_dtype),
        grid_spec=pltpu.PrefetchScalarGridSpec(
            num_scalar_prefetch=0,
            grid=grid,
            in_specs=[
                pl.BlockSpec((tm, tk), lambda i, k: (i, k)),       # adjacency row/col tile
                pl.BlockSpec((tk, f_in), lambda i, k: (k, 0)),     # matching H rows
                pl.BlockSpec((f_in, f_out), lambda i, k: (0, 0)),  # W resident (epilogue only)
                pl.BlockSpec((1, f_out), lambda i, k: (0, 0)),     # bias resident (f32)
            ],
            out_specs=pl.BlockSpec((tm, f_out), lambda i, k: (i, 0)),
            scratch_shapes=[pltpu.VMEM((tm, f_in), jnp.float32)],
        ),
        compiler_params=pltpu.CompilerParams(
            dimension_semantics=("parallel", "arbitrary"),
            vmem_limit_bytes=vmem_limit,
        ),
    )(adj_p, h_p, w_p, b_p)


# -----------------------------------------------------------------------------
# Host-side glue
# -----------------------------------------------------------------------------
def _round_up(x, m):
    return ((x + m - 1) // m) * m


def _choose_tiles(num_nodes):
    """Adjacency tile and padded node count.  Large graphs use 1024x1024 tiles (HBM-bound kernel:
    big tiles amortize the ~0.35us per-step overhead and cut H re-stream traffic); small graphs
    pad only to the next multiple of 256.  n_pad is always a multiple of the tile."""
    if num_nodes >= 1024:
        tile = 1024
    else:
        tile = max(256, _round_up(num_nodes, 256))
    n_pad = _round_up(num_nodes, tile)
    # NOTE(v7x): for peak megacore utilization keep n_pad // tile even when the graph is large.
    return tile, tile, n_pad


def _pad2(a, rows, cols, dtype):
    out = jnp.zeros((rows, cols), dtype)
    return out.at[:a.shape[0], :a.shape[1]].set(a.astype(dtype))


def build_normalized_adjacency(edge_index, num_nodes, dtype=jnp.float32):
    """Dense GCN normalization A_hat = D^-1/2 (A + I_remaining) D^-1/2.

    add_remaining_self_loops semantics (existing self-loops are not double counted), matching
    PyG's gcn_norm.  Build ONCE per graph."""
    src = edge_index[0]
    dst = edge_index[1]
    a = jnp.zeros((num_nodes, num_nodes), jnp.float32)
    a = a.at[dst, src].add(1.0)                       # message j -> i lands at A[i, j]
    diag = jnp.diagonal(a)
    a = a + jnp.diag(jnp.where(diag > 0, 0.0, 1.0))   # add self-loops only where missing
    deg = jnp.sum(a, axis=1)
    d_inv_sqrt = jnp.where(deg > 0, 1.0 / jnp.sqrt(deg), 0.0)
    return (d_inv_sqrt[:, None] * a * d_inv_sqrt[None, :]).astype(dtype)


def prepare_adjacency(adj_norm, dtype=jnp.bfloat16):
    """Pad + cast the normalized adjacency ONCE per graph (outside the jitted forward) so the
    per-call forward never re-reads/rewrites the O(N^2) matrix for layout conversion."""
    n = adj_norm.shape[0]
    _, _, n_pad = _choose_tiles(n)
    return _pad2(adj_norm, n_pad, n_pad, dtype)


@functools.partial(jax.jit, static_argnames=("num_nodes",))
def contrastive_gnn_forward(x, adj_p, params, *, num_nodes):
    """x: [N, num_features] f32, adj_p: [N_pad, N_pad] bf16 (pre-padded), params: dict of W/b."""
    n = num_nodes
    f_in = x.shape[1]
    h1 = params["w1"].shape[1]
    h2 = params["w2"].shape[1]
    emb = params["w3"].shape[1]

    tm, tk, n_pad = _choose_tiles(n)
    assert adj_p.shape == (n_pad, n_pad), (adj_p.shape, n_pad)

    f_in_p, h1_p, h2_p, emb_p = (_round_up(d, 128) for d in (f_in, h1, h2, emb))

    # bf16 matmul operands (f32 accumulation in-kernel); biases stay f32.  These are O(N*F) /
    # O(F*F) — negligible next to the O(N^2) adjacency stream.
    x_p = _pad2(x, n_pad, f_in_p, jnp.bfloat16)
    w1_p = _pad2(params["w1"], f_in_p, h1_p, jnp.bfloat16)
    w2_p = _pad2(params["w2"], h1_p, h2_p, jnp.bfloat16)
    w3_p = _pad2(params["w3"], h2_p, emb_p, jnp.bfloat16)
    b1_p = _pad2(params["b1"], 1, h1_p, jnp.float32)
    b2_p = _pad2(params["b2"], 1, h2_p, jnp.float32)
    b3_p = _pad2(params["b3"], 1, emb_p, jnp.float32)

    # Layers 1 & 2 emit bf16 (they feed the next layer's MXU); final layer emits f32 embeddings.
    hid = _gcn_layer(adj_p, x_p, w1_p, b1_p, apply_relu=True, out_dtype=jnp.bfloat16, tm=tm, tk=tk)
    hid = _gcn_layer(adj_p, hid, w2_p, b2_p, apply_relu=True, out_dtype=jnp.bfloat16, tm=tm, tk=tk)
    out = _gcn_layer(adj_p, hid, w3_p, b3_p, apply_relu=False, out_dtype=jnp.float32, tm=tm, tk=tk)

    return out[:n, :emb]   # drop node / lane padding


def init_params(key, num_features, hidden_dim1, hidden_dim2, embedding_dim):
    """Glorot-uniform init matching GCNConv parameter shapes (weights f32, biases zero)."""
    def glorot(k, fan_in, fan_out):
        limit = jnp.sqrt(6.0 / (fan_in + fan_out))
        return jax.random.uniform(k, (fan_in, fan_out), jnp.float32, -limit, limit)

    k1, k2, k3 = jax.random.split(key, 3)
    return {
        "w1": glorot(k1, num_features, hidden_dim1),
        "b1": jnp.zeros((1, hidden_dim1), jnp.float32),
        "w2": glorot(k2, hidden_dim1, hidden_dim2),
        "b2": jnp.zeros((1, hidden_dim2), jnp.float32),
        "w3": glorot(k3, hidden_dim2, embedding_dim),
        "b3": jnp.zeros((1, embedding_dim), jnp.float32),
    }


if __name__ == "__main__":
    key = jax.random.PRNGKey(0)
    k_x, k_e, k_p = jax.random.split(key, 3)

    # small synthetic graph
    num_nodes = 32
    num_features = 8
    hidden_dim1 = 32
    hidden_dim2 = 32
    embedding_dim = 16
    num_edges = 40

    x = jax.random.normal(k_x, (num_nodes, num_features), jnp.float32)
    src = jax.random.randint(k_e, (num_edges,), 0, num_nodes)
    dst = jax.random.randint(jax.random.fold_in(k_e, 1), (num_edges,), 0, num_nodes)
    # undirected graph: include both directions (torch_geometric convention)
    edge_index = jnp.stack([jnp.concatenate([src, dst]),
                            jnp.concatenate([dst, src])], axis=0).astype(jnp.int32)

    params = init_params(k_p, num_features, hidden_dim1, hidden_dim2, embedding_dim)

    # Build + pad + cast the normalized adjacency ONCE per graph (outside the jitted forward).
    adj = build_normalized_adjacency(edge_index, num_nodes)
    adj_p = prepare_adjacency(adj)

    out = contrastive_gnn_forward(x, adj_p, params, num_nodes=num_nodes)
    jax.block_until_ready(out)

    # sanity check against a pure-JAX f32 reference (kernel uses bf16 MXU inputs, f32 accum)
    h = jnp.maximum(adj @ (x @ params["w1"]) + params["b1"], 0.0)
    h = jnp.maximum(adj @ (h @ params["w2"]) + params["b2"], 0.0)
    ref = adj @ (h @ params["w3"]) + params["b3"]
    assert out.shape == (num_nodes, embedding_dim)
    assert jnp.allclose(out, ref, atol=5e-2, rtol=5e-2), float(jnp.max(jnp.abs(out - ref)))

    print("KERNEL_OK")
</pallas_src>

<mosaic_0001>
module attributes {stable_mosaic.version = 11 : i64} {
  func.func @_gcn_layer_kernel(%arg0: i32, %arg1: i32, %arg2: memref<256x256xbf16, #tpu.memory_space<vmem>>, %arg3: memref<256x128xbf16, #tpu.memory_space<vmem>>, %arg4: memref<128x128xbf16, #tpu.memory_space<vmem>>, %arg5: memref<1x128xf32, #tpu.memory_space<vmem>>, %arg6: memref<256x128xbf16, #tpu.memory_space<vmem>>, %arg7: memref<256x128xf32, #tpu.memory_space<vmem>>) attributes {dimension_semantics = [#tpu.dimension_semantics<parallel>, #tpu.dimension_semantics<arbitrary>], iteration_bounds = array<i64: 1, 1>, scalar_prefetch = 0 : i64, scratch_operands = 1 : i64, tpu.core_type = #tpu.core_type<tc>, window_params = [{transform_indices = @transform_0, window_bounds = array<i64: 256, 256>}, {transform_indices = @transform_1, window_bounds = array<i64: 256, 128>}, {pipeline_mode = #tpu.pipeline_mode<synchronous>, transform_indices = @transform_2, window_bounds = array<i64: 128, 128>}, {pipeline_mode = #tpu.pipeline_mode<synchronous>, transform_indices = @transform_3, window_bounds = array<i64: 1, 128>}, {transform_indices = @transform_4, window_bounds = array<i64: 256, 128>}]} {
    %c0_i32 = arith.constant 0 : i32
    %0 = arith.cmpi eq, %arg1, %c0_i32 : i32
    %1 = arith.extui %0 : i1 to i32
    %c0_i32_0 = arith.constant 0 : i32
    %2 = arith.cmpi ne, %1, %c0_i32_0 : i32
    scf.if %2 {
      %cst_10 = arith.constant 0.000000e+00 : f32
      %12 = vector.broadcast %cst_10 : f32 to vector<256x128xf32>
      %c0_11 = arith.constant 0 : index
      %c0_12 = arith.constant 0 : index
      %13 = vector.load %arg7[%c0_11, %c0_12] : memref<256x128xf32, #tpu.memory_space<vmem>>, vector<256x128xf32>
      tpu.vector_store %arg7[%c0_11, %c0_12], %12 {strides = array<i32>} : memref<256x128xf32, #tpu.memory_space<vmem>>, vector<256x128xf32>,
    } else {
    }
    %c0 = arith.constant 0 : index
    %c0_1 = arith.constant 0 : index
    %3 = vector.load %arg7[%c0, %c0_1] : memref<256x128xf32, #tpu.memory_space<vmem>>, vector<256x128xf32>
    %c0_2 = arith.constant 0 : index
    %c0_3 = arith.constant 0 : index
    %4 = vector.load %arg2[%c0_2, %c0_3] : memref<256x256xbf16, #tpu.memory_space<vmem>>, vector<256x256xbf16>
    %c0_4 = arith.constant 0 : index
    %c0_5 = arith.constant 0 : index
    %5 = vector.load %arg3[%c0_4, %c0_5] : memref<256x128xbf16, #tpu.memory_space<vmem>>, vector<256x128xbf16>
    %cst = arith.constant dense<0.000000e+00> : vector<256x128xf32>
    %6 = tpu.matmul %4, %5, %cst {dimension_numbers = #tpu.dot_dimension_numbers<[1], [0], [0], [1], [0, 0, 1, 1], [], []>} : vector<256x256xbf16>, vector<256x128xbf16>, vector<256x128xf32> -> vector<256x128xf32>
    %7 = arith.addf %3, %6 : vector<256x128xf32>
    %c0_6 = arith.constant 0 : index
    %c0_7 = arith.constant 0 : index
    %8 = vector.load %arg7[%c0_6, %c0_7] : memref<256x128xf32, #tpu.memory_space<vmem>>, vector<256x128xf32>
    tpu.vector_store %arg7[%c0_6, %c0_7], %7 {strides = array<i32>} : memref<256x128xf32, #tpu.memory_space<vmem>>, vector<256x128xf32>,
    %c0_i32_8 = arith.constant 0 : i32
    %9 = arith.cmpi eq, %arg1, %c0_i32_8 : i32
    %10 = arith.extui %9 : i1 to i32
    %c0_i32_9 = arith.constant 0 : i32
    %11 = arith.cmpi ne, %10, %c0_i32_9 : i32
    scf.if %11 {
      %c0_10 = arith.constant 0 : index
      %c0_11 = arith.constant 0 : index
      %12 = vector.load %arg7[%c0_10, %c0_11] : memref<256x128xf32, #tpu.memory_space<vmem>>, vector<256x128xf32>
      %13 = arith.truncf %12 : vector<256x128xf32> to vector<256x128xbf16>
      %c0_12 = arith.constant 0 : index
      %c0_13 = arith.constant 0 : index
      %14 = vector.load %arg4[%c0_12, %c0_13] : memref<128x128xbf16, #tpu.memory_space<vmem>>, vector<128x128xbf16>
      %cst_14 = arith.constant dense<0.000000e+00> : vector<256x128xf32>
      %15 = tpu.matmul %13, %14, %cst_14 {dimension_numbers = #tpu.dot_dimension_numbers<[1], [0], [0], [1], [0, 0, 1, 1], [], []>} : vector<256x128xbf16>, vector<128x128xbf16>, vector<256x128xf32> -> vector<256x128xf32>
      %c0_15 = arith.constant 0 : index
      %c0_16 = arith.constant 0 : index
      %16 = vector.load %arg5[%c0_15, %c0_16] : memref<1x128xf32, #tpu.memory_space<vmem>>, vector<1x128xf32>
      %17 = vector.broadcast %16 : vector<1x128xf32> to vector<256x128xf32>
      %18 = arith.addf %15, %17 : vector<256x128xf32>
      %cst_17 = arith.constant 0.000000e+00 : f32
      %19 = vector.broadcast %cst_17 : f32 to vector<256x128xf32>
      %20 = arith.maximumf %18, %19 : vector<256x128xf32>
      %21 = arith.truncf %20 : vector<256x128xf32> to vector<256x128xbf16>
      %c0_18 = arith.constant 0 : index
      %c0_19 = arith.constant 0 : index
      %22 = vector.load %arg6[%c0_18, %c0_19] : memref<256x128xbf16, #tpu.memory_space<vmem>>, vector<256x128xbf16>
      tpu.vector_store %arg6[%c0_18, %c0_19], %21 {strides = array<i32>} : memref<256x128xbf16, #tpu.memory_space<vmem>>, vector<256x128xbf16>,
    } else {
    }
    return
  }
  func.func @transform_0(%arg0: i32, %arg1: i32) -> (i32, i32) {
    %c0_i32 = arith.constant 0 : i32
    return %arg0, %arg1 : i32, i32
  }
  func.func @transform_1(%arg0: i32, %arg1: i32) -> (i32, i32) {
    %c0_i32 = arith.constant 0 : i32
    %c0_i32_0 = arith.constant 0 : i32
    return %arg1, %c0_i32 : i32, i32
  }
  func.func @transform_2(%arg0: i32, %arg1: i32) -> (i32, i32) {
    %c0_i32 = arith.constant 0 : i32
    %c0_i32_0 = arith.constant 0 : i32
    %c0_i32_1 = arith.constant 0 : i32
    return %c0_i32, %c0_i32_0 : i32, i32
  }
  func.func @transform_3(%arg0: i32, %arg1: i32) -> (i32, i32) {
    %c0_i32 = arith.constant 0 : i32
    %c0_i32_0 = arith.constant 0 : i32
    %c0_i32_1 = arith.constant 0 : i32
    return %c0_i32, %c0_i32_0 : i32, i32
  }
  func.func @transform_4(%arg0: i32, %arg1: i32) -> (i32, i32) {
    %c0_i32 = arith.constant 0 : i32
    %c0_i32_0 = arith.constant 0 : i32
    return %arg0, %c0_i32 : i32, i32
  }
}

module attributes {stable_mosaic.version = 11 : i64} {
  func.func @_gcn_layer_kernel(%arg0: i32, %arg1: i32, %arg2: memref<256x256xbf16, #tpu.memory_space<vmem>>, %arg3: memref<256x128xbf16, #tpu.memory_space<vmem>>, %arg4: memref<128x128xbf16, #tpu.memory_space<vmem>>, %arg5: memref<1x128xf32, #tpu.memory_space<vmem>>, %arg6: memref<256x128xf32, #tpu.memory_space<vmem>>, %arg7: memref<256x128xf32, #tpu.memory_space<vmem>>) attributes {dimension_semantics = [#tpu.dimension_semantics<parallel>, #tpu.dimension_semantics<arbitrary>], iteration_bounds = array<i64: 1, 1>, scalar_prefetch = 0 : i64, scratch_operands = 1 : i64, tpu.core_type = #tpu.core_type<tc>, window_params = [{transform_indices = @transform_0, window_bounds = array<i64: 256, 256>}, {transform_indices = @transform_1, window_bounds = array<i64: 256, 128>}, {pipeline_mode = #tpu.pipeline_mode<synchronous>, transform_indices = @transform_2, window_bounds = array<i64: 128, 128>}, {pipeline_mode = #tpu.pipeline_mode<synchronous>, transform_indices = @transform_3, window_bounds = array<i64: 1, 128>}, {transform_indices = @transform_4, window_bounds = array<i64: 256, 128>}]} {
    %c0_i32 = arith.constant 0 : i32
    %0 = arith.cmpi eq, %arg1, %c0_i32 : i32
    %1 = arith.extui %0 : i1 to i32
    %c0_i32_0 = arith.constant 0 : i32
    %2 = arith.cmpi ne, %1, %c0_i32_0 : i32
    scf.if %2 {
      %cst_10 = arith.constant 0.000000e+00 : f32
      %12 = vector.broadcast %cst_10 : f32 to vector<256x128xf32>
      %c0_11 = arith.constant 0 : index
      %c0_12 = arith.constant 0 : index
      %13 = vector.load %arg7[%c0_11, %c0_12] : memref<256x128xf32, #tpu.memory_space<vmem>>, vector<256x128xf32>
      tpu.vector_store %arg7[%c0_11, %c0_12], %12 {strides = array<i32>} : memref<256x128xf32, #tpu.memory_space<vmem>>, vector<256x128xf32>,
    } else {
    }
    %c0 = arith.constant 0 : index
    %c0_1 = arith.constant 0 : index
    %3 = vector.load %arg7[%c0, %c0_1] : memref<256x128xf32, #tpu.memory_space<vmem>>, vector<256x128xf32>
    %c0_2 = arith.constant 0 : index
    %c0_3 = arith.constant 0 : index
    %4 = vector.load %arg2[%c0_2, %c0_3] : memref<256x256xbf16, #tpu.memory_space<vmem>>, vector<256x256xbf16>
    %c0_4 = arith.constant 0 : index
    %c0_5 = arith.constant 0 : index
    %5 = vector.load %arg3[%c0_4, %c0_5] : memref<256x128xbf16, #tpu.memory_space<vmem>>, vector<256x128xbf16>
    %cst = arith.constant dense<0.000000e+00> : vector<256x128xf32>
    %6 = tpu.matmul %4, %5, %cst {dimension_numbers = #tpu.dot_dimension_numbers<[1], [0], [0], [1], [0, 0, 1, 1], [], []>} : vector<256x256xbf16>, vector<256x128xbf16>, vector<256x128xf32> -> vector<256x128xf32>
    %7 = arith.addf %3, %6 : vector<256x128xf32>
    %c0_6 = arith.constant 0 : index
    %c0_7 = arith.constant 0 : index
    %8 = vector.load %arg7[%c0_6, %c0_7] : memref<256x128xf32, #tpu.memory_space<vmem>>, vector<256x128xf32>
    tpu.vector_store %arg7[%c0_6, %c0_7], %7 {strides = array<i32>} : memref<256x128xf32, #tpu.memory_space<vmem>>, vector<256x128xf32>,
    %c0_i32_8 = arith.constant 0 : i32
    %9 = arith.cmpi eq, %arg1, %c0_i32_8 : i32
    %10 = arith.extui %9 : i1 to i32
    %c0_i32_9 = arith.constant 0 : i32
    %11 = arith.cmpi ne, %10, %c0_i32_9 : i32
    scf.if %11 {
      %c0_10 = arith.constant 0 : index
      %c0_11 = arith.constant 0 : index
      %12 = vector.load %arg7[%c0_10, %c0_11] : memref<256x128xf32, #tpu.memory_space<vmem>>, vector<256x128xf32>
      %13 = arith.truncf %12 : vector<256x128xf32> to vector<256x128xbf16>
      %c0_12 = arith.constant 0 : index
      %c0_13 = arith.constant 0 : index
      %14 = vector.load %arg4[%c0_12, %c0_13] : memref<128x128xbf16, #tpu.memory_space<vmem>>, vector<128x128xbf16>
      %cst_14 = arith.constant dense<0.000000e+00> : vector<256x128xf32>
      %15 = tpu.matmul %13, %14, %cst_14 {dimension_numbers = #tpu.dot_dimension_numbers<[1], [0], [0], [1], [0, 0, 1, 1], [], []>} : vector<256x128xbf16>, vector<128x128xbf16>, vector<256x128xf32> -> vector<256x128xf32>
      %c0_15 = arith.constant 0 : index
      %c0_16 = arith.constant 0 : index
      %16 = vector.load %arg5[%c0_15, %c0_16] : memref<1x128xf32, #tpu.memory_space<vmem>>, vector<1x128xf32>
      %17 = vector.broadcast %16 : vector<1x128xf32> to vector<256x128xf32>
      %18 = arith.addf %15, %17 : vector<256x128xf32>
      %c0_17 = arith.constant 0 : index
      %c0_18 = arith.constant 0 : index
      %19 = vector.load %arg6[%c0_17, %c0_18] : memref<256x128xf32, #tpu.memory_space<vmem>>, vector<256x128xf32>
      tpu.vector_store %arg6[%c0_17, %c0_18], %18 {strides = array<i32>} : memref<256x128xf32, #tpu.memory_space<vmem>>, vector<256x128xf32>,
    } else {
    }
    return
  }
  func.func @transform_0(%arg0: i32, %arg1: i32) -> (i32, i32) {
    %c0_i32 = arith.constant 0 : i32
    return %arg0, %arg1 : i32, i32
  }
  func.func @transform_1(%arg0: i32, %arg1: i32) -> (i32, i32) {
    %c0_i32 = arith.constant 0 : i32
    %c0_i32_0 = arith.constant 0 : i32
    return %arg1, %c0_i32 : i32, i32
  }
  func.func @transform_2(%arg0: i32, %arg1: i32) -> (i32, i32) {
    %c0_i32 = arith.constant 0 : i32
    %c0_i32_0 = arith.constant 0 : i32
    %c0_i32_1 = arith.constant 0 : i32
    return %c0_i32, %c0_i32_0 : i32, i32
  }
  func.func @transform_3(%arg0: i32, %arg1: i32) -> (i32, i32) {
    %c0_i32 = arith.constant 0 : i32
    %c0_i32_0 = arith.constant 0 : i32
    %c0_i32_1 = arith.constant 0 : i32
    return %c0_i32, %c0_i32_0 : i32, i32
  }
  func.func @transform_4(%arg0: i32, %arg1: i32) -> (i32, i32) {
    %c0_i32 = arith.constant 0 : i32
    %c0_i32_0 = arith.constant 0 : i32
    return %arg0, %c0_i32 : i32, i32
  }
}

</mosaic_0001>

<llo_original>
// kernel: contrastive_gnn_forward.5
$region0: #{contrastive_gnn_forward.5}
  #allocation0 [shape = 'u32[]', space=smem, size = 0x4, offset = 0x4, fixed_abs, tag = 'smem constant byte address 0x4 - core index']
  #allocation1 [shape = 'u32[144,128]{1,0:T(1,128)}', space=vmem, size = 0x12000, scoped, tag = 'internal scratch']
  #allocation2 [shape = 'f32[256,128]{1,0:T(8,128)}', space=vmem, size = 0x20000, scoped, tag = 'scratch operand']
  %s0 = inlined_call_operand.vmem [shape: bf16[256,256], index: 0, kind: input, shape index: {}]
  %s1 = inlined_call_operand.vmem [shape: bf16[256,128], index: 1, kind: input, shape index: {}]
  %s2 = inlined_call_operand.vmem [shape: bf16[128,128], index: 2, kind: input, shape index: {}]
  %s3 = inlined_call_operand.vmem [shape: f32[1,128], index: 3, kind: input, shape index: {}]
  %s4 = inlined_call_operand.vmem [shape: f32[256,128], index: 4, kind: output, shape index: {}]
  %s5 = sld [smem:[#allocation0]]
  $region34: #{contrastive_gnn_forward.5} parent=0
    _
  %s7 = ssub.s32 1, %s5
  %s8 = scalar_select 0, %s7, %s5
  // Predicated region
  $region2: #{contrastive_gnn_forward.5} parent=0 // pred_check
    _
  $region3: #{contrastive_gnn_forward.5} parent=0 // pred_check_branch
    %10 = sbr.rel (0) target = $region5
  $region4: #{contrastive_gnn_forward.5} parent=0 // pred_region
    _
  $region5: #{contrastive_gnn_forward.5} parent=0 // pred_fallthru
    _
  // Predicated region
  $region6: #{contrastive_gnn_forward.5} parent=0 // pred_check
    _
  $region7: #{contrastive_gnn_forward.5} parent=0 // pred_check_branch
    %12 = sbr.rel (0) target = $region9
  $region8: #{contrastive_gnn_forward.5} parent=0 // pred_region
    _
  $region9: #{contrastive_gnn_forward.5} parent=0 // pred_fallthru
    _
  // Predicated region
  $region10: #{contrastive_gnn_forward.5} parent=0 // pred_check
    _
  $region11: #{contrastive_gnn_forward.5} parent=0 // pred_check_branch
    %14 = sbr.rel (0) target = $region13
  $region12: #{contrastive_gnn_forward.5} parent=0 // pred_region
    _
  $region13: #{contrastive_gnn_forward.5} parent=0 // pred_fallthru
    _
  // Predicated region
  $region14: #{contrastive_gnn_forward.5} parent=0 // pred_check
    _
  $region15: #{contrastive_gnn_forward.5} parent=0 // pred_check_branch
    %16 = sbr.rel (0) target = $region17
  $region16: #{contrastive_gnn_forward.5} parent=0 // pred_region
    _
  $region17: #{contrastive_gnn_forward.5} parent=0 // pred_fallthru
    _
  %p18 = scmp.eq.s32.totalorder 0, 0
  // Predicated region
  $region18: #{contrastive_gnn_forward.5} parent=0 // pred_check
    %p19 = pneg %p18
  $region19: #{contrastive_gnn_forward.5} parent=0 // pred_check_branch
    %21 = sbr.rel (%p19) target = $region21
  $region20: #{contrastive_gnn_forward.5} parent=0 // pred_region
    %22 = vst [vmem:[#allocation2] sm:$0xff] 0.0
    %23 = vst [vmem:[#allocation2 + $0x8] sm:$0xff] 0.0
    %24 = vst [vmem:[#allocation2 + $0x10] sm:$0xff] 0.0
    %25 = vst [vmem:[#allocation2 + $0x18] sm:$0xff] 0.0
    %26 = vst [vmem:[#allocation2 + $0x20] sm:$0xff] 0.0
    %27 = vst [vmem:[#allocation2 + $0x28] sm:$0xff] 0.0
    %28 = vst [vmem:[#allocation2 + $0x30] sm:$0xff] 0.0
    %29 = vst [vmem:[#allocation2 + $0x38] sm:$0xff] 0.0
    %30 = vst [vmem:[#allocation2 + $0x40] sm:$0xff] 0.0
    %31 = vst [vmem:[#allocation2 + $0x48] sm:$0xff] 0.0
    %32 = vst [vmem:[#allocation2 + $0x50] sm:$0xff] 0.0
    %33 = vst [vmem:[#allocation2 + $0x58] sm:$0xff] 0.0
    %34 = vst [vmem:[#allocation2 + $0x60] sm:$0xff] 0.0
    %35 = vst [vmem:[#allocation2 + $0x68] sm:$0xff] 0.0
    %36 = vst [vmem:[#allocation2 + $0x70] sm:$0xff] 0.0
    %37 = vst [vmem:[#allocation2 + $0x78] sm:$0xff] 0.0
    %38 = vst [vmem:[#allocation2 + $0x80] sm:$0xff] 0.0
    %39 = vst [vmem:[#allocation2 + $0x88] sm:$0xff] 0.0
    %40 = vst [vmem:[#allocation2 + $0x90] sm:$0xff] 0.0
    %41 = vst [vmem:[#allocation2 + $0x98] sm:$0xff] 0.0
    %42 = vst [vmem:[#allocation2 + $0xa0] sm:$0xff] 0.0
    %43 = vst [vmem:[#allocation2 + $0xa8] sm:$0xff] 0.0
    %44 = vst [vmem:[#allocation2 + $0xb0] sm:$0xff] 0.0
    %45 = vst [vmem:[#allocation2 + $0xb8] sm:$0xff] 0.0
    %46 = vst [vmem:[#allocation2 + $0xc0] sm:$0xff] 0.0
    %47 = vst [vmem:[#allocation2 + $0xc8] sm:$0xff] 0.0
    %48 = vst [vmem:[#allocation2 + $0xd0] sm:$0xff] 0.0
    %49 = vst [vmem:[#allocation2 + $0xd8] sm:$0xff] 0.0
    %50 = vst [vmem:[#allocation2 + $0xe0] sm:$0xff] 0.0
    %51 = vst [vmem:[#allocation2 + $0xe8] sm:$0xff] 0.0
    %52 = vst [vmem:[#allocation2 + $0xf0] sm:$0xff] 0.0
    %53 = vst [vmem:[#allocation2 + $0xf8] sm:$0xff] 0.0
  $region21: #{contrastive_gnn_forward.5} parent=0 // pred_fallthru
    _
  %v54 = vld [vmem:[#allocation2] sm:$0xff]
  %v55 = vld [vmem:[#allocation2 + $0x8] sm:$0xff]
  %v56 = vld [vmem:[#allocation2 + $0x10] sm:$0xff]
  %v57 = vld [vmem:[#allocation2 + $0x18] sm:$0xff]
  %v58 = vld [vmem:[#allocation2 + $0x20] sm:$0xff]
  %v59 = vld [vmem:[#allocation2 + $0x28] sm:$0xff]
  %v60 = vld [vmem:[#allocation2 + $0x30] sm:$0xff]
  %v61 = vld [vmem:[#allocation2 + $0x38] sm:$0xff]
  %v62 = vld [vmem:[#allocation2 + $0x40] sm:$0xff]
  %v63 = vld [vmem:[#allocation2 + $0x48] sm:$0xff]
  %v64 = vld [vmem:[#allocation2 + $0x50] sm:$0xff]
  %v65 = vld [vmem:[#allocation2 + $0x58] sm:$0xff]
  %v66 = vld [vmem:[#allocation2 + $0x60] sm:$0xff]
  %v67 = vld [vmem:[#allocation2 + $0x68] sm:$0xff]
  %v68 = vld [vmem:[#allocation2 + $0x70] sm:$0xff]
  %v69 = vld [vmem:[#allocation2 + $0x78] sm:$0xff]
  %v70 = vld [vmem:[#allocation2 + $0x80] sm:$0xff]
  %v71 = vld [vmem:[#allocation2 + $0x88] sm:$0xff]
  %v72 = vld [vmem:[#allocation2 + $0x90] sm:$0xff]
  %v73 = vld [vmem:[#allocation2 + $0x98] sm:$0xff]
  %v74 = vld [vmem:[#allocation2 + $0xa0] sm:$0xff]
  %v75 = vld [vmem:[#allocation2 + $0xa8] sm:$0xff]
  %v76 = vld [vmem:[#allocation2 + $0xb0] sm:$0xff]
  %v77 = vld [vmem:[#allocation2 + $0xb8] sm:$0xff]
  %v78 = vld [vmem:[#allocation2 + $0xc0] sm:$0xff]
  %v79 = vld [vmem:[#allocation2 + $0xc8] sm:$0xff]
  %v80 = vld [vmem:[#allocation2 + $0xd0] sm:$0xff]
  %v81 = vld [vmem:[#allocation2 + $0xd8] sm:$0xff]
  %v82 = vld [vmem:[#allocation2 + $0xe0] sm:$0xff]
  %v83 = vld [vmem:[#allocation2 + $0xe8] sm:$0xff]
  %v84 = vld [vmem:[#allocation2 + $0xf0] sm:$0xff]
  %v85 = vld [vmem:[#allocation2 + $0xf8] sm:$0xff]
  %v86 = vld [vmem:[%s0] sm:$0xff]
  %v87 = vld [vmem:[%s0 + $0x8] sm:$0xff]
  %v88 = vld [vmem:[%s0 + $0x10] sm:$0xff]
  %v89 = vld [vmem:[%s0 + $0x18] sm:$0xff]
  %v90 = vld [vmem:[%s0 + $0x20] sm:$0xff]
  %v91 = vld [vmem:[%s0 + $0x28] sm:$0xff]
  %v92 = vld [vmem:[%s0 + $0x30] sm:$0xff]
  %v93 = vld [vmem:[%s0 + $0x38] sm:$0xff]
  %v94 = vld [vmem:[%s0 + $0x40] sm:$0xff]
  %v95 = vld [vmem:[%s0 + $0x48] sm:$0xff]
  %v96 = vld [vmem:[%s0 + $0x50] sm:$0xff]
  %v97 = vld [vmem:[%s0 + $0x58] sm:$0xff]
  %v98 = vld [vmem:[%s0 + $0x60] sm:$0xff]
  %v99 = vld [vmem:[%s0 + $0x68] sm:$0xff]
  %v100 = vld [vmem:[%s0 + $0x70] sm:$0xff]
  %v101 = vld [vmem:[%s0 + $0x78] sm:$0xff]
  %v102 = vld [vmem:[%s0 + $0x80] sm:$0xff]
  %v103 = vld [vmem:[%s0 + $0x88] sm:$0xff]
  %v104 = vld [vmem:[%s0 + $0x90] sm:$0xff]
  %v105 = vld [vmem:[%s0 + $0x98] sm:$0xff]
  %v106 = vld [vmem:[%s0 + $0xa0] sm:$0xff]
  %v107 = vld [vmem:[%s0 + $0xa8] sm:$0xff]
  %v108 = vld [vmem:[%s0 + $0xb0] sm:$0xff]
  %v109 = vld [vmem:[%s0 + $0xb8] sm:$0xff]
  %v110 = vld [vmem:[%s0 + $0xc0] sm:$0xff]
  %v111 = vld [vmem:[%s0 + $0xc8] sm:$0xff]
  %v112 = vld [vmem:[%s0 + $0xd0] sm:$0xff]
  %v113 = vld [vmem:[%s0 + $0xd8] sm:$0xff]
  %v114 = vld [vmem:[%s0 + $0xe0] sm:$0xff]
  %v115 = vld [vmem:[%s0 + $0xe8] sm:$0xff]
  %v116 = vld [vmem:[%s0 + $0xf0] sm:$0xff]
  %v117 = vld [vmem:[%s0 + $0xf8] sm:$0xff]
  %v118 = vld [vmem:[%s1] sm:$0xf]
  %v119 = vld [vmem:[%s1 + $0x4] sm:$0xf]
  %v120 = vld [vmem:[%s1 + $0x8] sm:$0xf]
  %v121 = vld [vmem:[%s1 + $0xc] sm:$0xf]
  %v122 = vld [vmem:[%s1 + $0x10] sm:$0xf]
  %v123 = vld [vmem:[%s1 + $0x14] sm:$0xf]
  %v124 = vld [vmem:[%s1 + $0x18] sm:$0xf]
  %v125 = vld [vmem:[%s1 + $0x1c] sm:$0xf]
  %v126 = vld [vmem:[%s1 + $0x20] sm:$0xf]
  %v127 = vld [vmem:[%s1 + $0x24] sm:$0xf]
  %v128 = vld [vmem:[%s1 + $0x28] sm:$0xf]
  %v129 = vld [vmem:[%s1 + $0x2c] sm:$0xf]
  %v130 = vld [vmem:[%s1 + $0x30] sm:$0xf]
  %v131 = vld [vmem:[%s1 + $0x34] sm:$0xf]
  %v132 = vld [vmem:[%s1 + $0x38] sm:$0xf]
  %v133 = vld [vmem:[%s1 + $0x3c] sm:$0xf]
  %v134 = vld [vmem:[%s1 + $0x40] sm:$0xf]
  %v135 = vld [vmem:[%s1 + $0x44] sm:$0xf]
  %v136 = vld [vmem:[%s1 + $0x48] sm:$0xf]
  %v137 = vld [vmem:[%s1 + $0x4c] sm:$0xf]
  %v138 = vld [vmem:[%s1 + $0x50] sm:$0xf]
  %v139 = vld [vmem:[%s1 + $0x54] sm:$0xf]
  %v140 = vld [vmem:[%s1 + $0x58] sm:$0xf]
  %v141 = vld [vmem:[%s1 + $0x5c] sm:$0xf]
  %v142 = vld [vmem:[%s1 + $0x60] sm:$0xf]
  %v143 = vld [vmem:[%s1 + $0x64] sm:$0xf]
  %v144 = vld [vmem:[%s1 + $0x68] sm:$0xf]
  %v145 = vld [vmem:[%s1 + $0x6c] sm:$0xf]
  %v146 = vld [vmem:[%s1 + $0x70] sm:$0xf]
  %v147 = vld [vmem:[%s1 + $0x74] sm:$0xf]
  %v148 = vld [vmem:[%s1 + $0x78] sm:$0xf]
  %v149 = vld [vmem:[%s1 + $0x7c] sm:$0xf]
  %v182 = vunpack.c.l.b16 %v86
  %v183 = vunpack.c.h.b16 %v86
  %v184 = vunpack.c.l.b16 %v87
  %v185 = vunpack.c.h.b16 %v87
  %v186 = vunpack.c.l.b16 %v88
  %v187 = vunpack.c.h.b16 %v88
  %v188 = vunpack.c.l.b16 %v89
  %v189 = vunpack.c.h.b16 %v89
  %v190 = vunpack.c.l.b16 %v90
  %v191 = vunpack.c.h.b16 %v90
  %v192 = vunpack.c.l.b16 %v91
  %v193 = vunpack.c.h.b16 %v91
  %v194 = vunpack.c.l.b16 %v92
  %v195 = vunpack.c.h.b16 %v92
  %v196 = vunpack.c.l.b16 %v93
  %v197 = vunpack.c.h.b16 %v93
  %v198 = vunpack.c.l.b16 %v94
  %v199 = vunpack.c.h.b16 %v94
  %v200 = vunpack.c.l.b16 %v95
  %v201 = vunpack.c.h.b16 %v95
  %v202 = vunpack.c.l.b16 %v96
  %v203 = vunpack.c.h.b16 %v96
  %v204 = vunpack.c.l.b16 %v97
  %v205 = vunpack.c.h.b16 %v97
  %v206 = vunpack.c.l.b16 %v98
  %v207 = vunpack.c.h.b16 %v98
  %v208 = vunpack.c.l.b16 %v99
  %v209 = vunpack.c.h.b16 %v99
  %v210 = vunpack.c.l.b16 %v100
  %v211 = vunpack.c.h.b16 %v100
  %v212 = vunpack.c.l.b16 %v101
  %v213 = vunpack.c.h.b16 %v101
  %v214 = vunpack.c.l.b16 %v102
  %v215 = vunpack.c.h.b16 %v102
  %v216 = vunpack.c.l.b16 %v103
  %v217 = vunpack.c.h.b16 %v103
  %v218 = vunpack.c.l.b16 %v104
  %v219 = vunpack.c.h.b16 %v104
  %v220 = vunpack.c.l.b16 %v105
  %v221 = vunpack.c.h.b16 %v105
  %v222 = vunpack.c.l.b16 %v106
  %v223 = vunpack.c.h.b16 %v106
  %v224 = vunpack.c.l.b16 %v107
  %v225 = vunpack.c.h.b16 %v107
  %v226 = vunpack.c.l.b16 %v108
  %v227 = vunpack.c.h.b16 %v108
  %v228 = vunpack.c.l.b16 %v109
  %v229 = vunpack.c.h.b16 %v109
  %v230 = vunpack.c.l.b16 %v110
  %v231 = vunpack.c.h.b16 %v110
  %v232 = vunpack.c.l.b16 %v111
  %v233 = vunpack.c.h.b16 %v111
  %v234 = vunpack.c.l.b16 %v112
  %v235 = vunpack.c.h.b16 %v112
  %v236 = vunpack.c.l.b16 %v113
  %v237 = vunpack.c.h.b16 %v113
  %v238 = vunpack.c.l.b16 %v114
  %v239 = vunpack.c.h.b16 %v114
  %v240 = vunpack.c.l.b16 %v115
  %v241 = vunpack.c.h.b16 %v115
  %v242 = vunpack.c.l.b16 %v116
  %v243 = vunpack.c.h.b16 %v116
  %v244 = vunpack.c.l.b16 %v117
  %v245 = vunpack.c.h.b16 %v117
  %v246 = vpack.c.b16 %v184, %v182
  %v247 = vpack.c.b16 %v185, %v183
  %v248 = vpack.c.b16 %v188, %v186
  %v249 = vpack.c.b16 %v189, %v187
  %v250 = vpack.c.b16 %v192, %v190
  %v251 = vpack.c.b16 %v193, %v191
  %v252 = vpack.c.b16 %v196, %v194
  %v253 = vpack.c.b16 %v197, %v195
  %v254 = vpack.c.b16 %v200, %v198
  %v255 = vpack.c.b16 %v201, %v199
  %v256 = vpack.c.b16 %v204, %v202
  %v257 = vpack.c.b16 %v205, %v203
  %v258 = vpack.c.b16 %v208, %v206
  %v259 = vpack.c.b16 %v209, %v207
  %v260 = vpack.c.b16 %v212, %v210
  %v261 = vpack.c.b16 %v213, %v211
  %v262 = vpack.c.b16 %v216, %v214
  %v263 = vpack.c.b16 %v217, %v215
  %v264 = vpack.c.b16 %v220, %v218
  %v265 = vpack.c.b16 %v221, %v219
  %v266 = vpack.c.b16 %v224, %v222
  %v267 = vpack.c.b16 %v225, %v223
  %v268 = vpack.c.b16 %v228, %v226
  %v269 = vpack.c.b16 %v229, %v227
  %v270 = vpack.c.b16 %v232, %v230
  %v271 = vpack.c.b16 %v233, %v231
  %v272 = vpack.c.b16 %v236, %v234
  %v273 = vpack.c.b16 %v237, %v235
  %v274 = vpack.c.b16 %v240, %v238
  %v275 = vpack.c.b16 %v241, %v239
  %v276 = vpack.c.b16 %v244, %v242
  %v277 = vpack.c.b16 %v245, %v243
  %v342 = vunpack.c.l.b16 %v118
  %v343 = vunpack.c.l.b16 %v119
  %v344 = vunpack.c.l.b16 %v120
  %v345 = vunpack.c.l.b16 %v121
  %v346 = vunpack.c.l.b16 %v122
  %v347 = vunpack.c.l.b16 %v123
  %v348 = vunpack.c.l.b16 %v124
  %v349 = vunpack.c.l.b16 %v125
  %v350 = vunpack.c.l.b16 %v126
  %v351 = vunpack.c.l.b16 %v127
  %v352 = vunpack.c.l.b16 %v128
  %v353 = vunpack.c.l.b16 %v129
  %v354 = vunpack.c.l.b16 %v130
  %v355 = vunpack.c.l.b16 %v131
  %v356 = vunpack.c.l.b16 %v132
  %v357 = vunpack.c.l.b16 %v133
  %v358 = vunpack.c.l.b16 %v134
  %v359 = vunpack.c.l.b16 %v135
  %v360 = vunpack.c.l.b16 %v136
  %v361 = vunpack.c.l.b16 %v137
  %v362 = vunpack.c.l.b16 %v138
  %v363 = vunpack.c.l.b16 %v139
  %v364 = vunpack.c.l.b16 %v140
  %v365 = vunpack.c.l.b16 %v141
  %v366 = vunpack.c.l.b16 %v142
  %v367 = vunpack.c.l.b16 %v143
  %v368 = vunpack.c.l.b16 %v144
  %v369 = vunpack.c.l.b16 %v145
  %v370 = vunpack.c.l.b16 %v146
  %v371 = vunpack.c.l.b16 %v147
  %v372 = vunpack.c.l.b16 %v148
  %v373 = vunpack.c.l.b16 %v149
  %v374 = vpack.c.b16 %v343, %v342
  %v375 = vpack.c.b16 %v345, %v344
  %v376 = vpack.c.b16 %v347, %v346
  %v377 = vpack.c.b16 %v349, %v348
  %v378 = vpack.c.b16 %v351, %v350
  %v379 = vpack.c.b16 %v353, %v352
  %v380 = vpack.c.b16 %v355, %v354
  %v381 = vpack.c.b16 %v357, %v356
  %v382 = vpack.c.b16 %v359, %v358
  %v383 = vpack.c.b16 %v361, %v360
  %v384 = vpack.c.b16 %v363, %v362
  %v385 = vpack.c.b16 %v365, %v364
  %v386 = vpack.c.b16 %v367, %v366
  %v387 = vpack.c.b16 %v369, %v368
  %v388 = vpack.c.b16 %v371, %v370
  %v389 = vpack.c.b16 %v373, %v372
  %406 = vmatprep.subr.bf16.mxu0 0
  %407 = vmatpush1.bf16.msra.mxu0 %v374
  %408 = vmatprep.subr.bf16.mxu0 0
  %409 = vmatpush1.bf16.msra.mxu0 %v375
  %410 = vmatprep.subr.bf16.mxu0 0
  %411 = vmatpush1.bf16.msra.mxu0 %v376
  %412 = vmatprep.subr.bf16.mxu0 0
  %413 = vmatpush1.bf16.msra.mxu0 %v377
  %414 = vmatprep.subr.bf16.mxu0 0
  %415 = vmatpush1.bf16.msra.mxu0 %v378
  %416 = vmatprep.subr.bf16.mxu0 0
  %417 = vmatpush1.bf16.msra.mxu0 %v379
  %418 = vmatprep.subr.bf16.mxu0 0
  %419 = vmatpush1.bf16.msra.mxu0 %v380
  %420 = vmatprep.subr.bf16.mxu0 0
  %421 = vmatpush1.bf16.msra.mxu0 %v381
  %422 = vmatprep.subr.bf16.mxu0 0
  %423 = vmatpush1.bf16.msra.mxu0 %v382
  %424 = vmatprep.subr.bf16.mxu0 0
  %425 = vmatpush1.bf16.msra.mxu0 %v383
  %426 = vmatprep.subr.bf16.mxu0 0
  %427 = vmatpush1.bf16.msra.mxu0 %v384
  %428 = vmatprep.subr.bf16.mxu0 0
  %429 = vmatpush1.bf16.msra.mxu0 %v385
  %430 = vmatprep.subr.bf16.mxu0 0
  %431 = vmatpush1.bf16.msra.mxu0 %v386
  %432 = vmatprep.subr.bf16.mxu0 0
  %433 = vmatpush1.bf16.msra.mxu0 %v387
  %434 = vmatprep.subr.bf16.mxu0 0
  %435 = vmatpush1.bf16.msra.mxu0 %v388
  %436 = vmatprep.subr.bf16.mxu0 0
  %437 = vmatpush1.bf16.msra.mxu0 %v389
  %438 = vmatprep.mubr.bf16.mxu0 %v247
  %439 = vmatmul.mubr.bf16.gmra.mrb[0].mxu0 %v246
  %v440 = vpop.f32.mrb[0].mxu0
  %v441 = vadd.f32 0.0, %v440
  %v442 = vpop.f32.mrb[0].mxu0
  %v443 = vpop.f32.mrb[0].mxu0
  %v444 = vadd.f32 0.0, %v443
  %v445 = vpop.f32.mrb[0].mxu0
  %446 = vmatprep.mubr.bf16.mxu0 %v249
  %447 = vmatmul.mubr.bf16.gmra.mrb[0].mxu0 %v248
  %v448 = vpop.f32.mrb[0].mxu0
  %v449 = vadd.f32 0.0, %v448
  %v450 = vpop.f32.mrb[0].mxu0
  %v451 = vpop.f32.mrb[0].mxu0
  %v452 = vadd.f32 0.0, %v451
  %v453 = vpop.f32.mrb[0].mxu0
  %454 = vmatprep.mubr.bf16.mxu0 %v251
  %455 = vmatmul.mubr.bf16.gmra.mrb[0].mxu0 %v250
  %v456 = vpop.f32.mrb[0].mxu0
  %v457 = vadd.f32 0.0, %v456
  %v458 = vpop.f32.mrb[0].mxu0
  %v459 = vpop.f32.mrb[0].mxu0
  %v460 = vadd.f32 0.0, %v459
  %v461 = vpop.f32.mrb[0].mxu0
  %462 = vmatprep.mubr.bf16.mxu0 %v253
  %463 = vmatmul.mubr.bf16.gmra.mrb[0].mxu0 %v252
  %v464 = vpop.f32.mrb[0].mxu0
  %v465 = vadd.f32 0.0, %v464
  %v466 = vpop.f32.mrb[0].mxu0
  %v467 = vpop.f32.mrb[0].mxu0
  %v468 = vadd.f32 0.0, %v467
  %v469 = vpop.f32.mrb[0].mxu0
  %470 = vmatprep.mubr.bf16.mxu0 %v255
  %471 = vmatmul.mubr.bf16.gmra.mrb[0].mxu0 %v254
  %v472 = vpop.f32.mrb[0].mxu0
  %v473 = vadd.f32 0.0, %v472
  %v474 = vpop.f32.mrb[0].mxu0
  %v475 = vpop.f32.mrb[0].mxu0
  %v476 = vadd.f32 0.0, %v475
  %v477 = vpop.f32.mrb[0].mxu0
  %478 = vmatprep.mubr.bf16.mxu0 %v257
  %479 = vmatmul.mubr.bf16.gmra.mrb[0].mxu0 %v256
  %v480 = vpop.f32.mrb[0].mxu0
  %v481 = vadd.f32 0.0, %v480
  %v482 = vpop.f32.mrb[0].mxu0
  %v483 = vpop.f32.mrb[0].mxu0
  %v484 = vadd.f32 0.0, %v483
  %v485 = vpop.f32.mrb[0].mxu0
  %486 = vmatprep.mubr.bf16.mxu0 %v259
  %487 = vmatmul.mubr.bf16.gmra.mrb[0].mxu0 %v258
  %v488 = vpop.f32.mrb[0].mxu0
  %v489 = vadd.f32 0.0, %v488
  %v490 = vpop.f32.mrb[0].mxu0
  %v491 = vpop.f32.mrb[0].mxu0
  %v492 = vadd.f32 0.0, %v491
  %v493 = vpop.f32.mrb[0].mxu0
  %494 = vmatprep.mubr.bf16.mxu0 %v261
  %495 = vmatmul.mubr.bf16.gmra.mrb[0].mxu0 %v260
  %v496 = vpop.f32.mrb[0].mxu0
  %v497 = vadd.f32 0.0, %v496
  %v498 = vpop.f32.mrb[0].mxu0
  %v499 = vpop.f32.mrb[0].mxu0
  %v500 = vadd.f32 0.0, %v499
  %v501 = vpop.f32.mrb[0].mxu0
  %502 = vmatprep.mubr.bf16.mxu0 %v263
  %503 = vmatmul.mubr.bf16.gmra.mrb[0].mxu0 %v262
  %v504 = vpop.f32.mrb[0].mxu0
  %v505 = vadd.f32 0.0, %v504
  %v506 = vpop.f32.mrb[0].mxu0
  %v507 = vpop.f32.mrb[0].mxu0
  %v508 = vadd.f32 0.0, %v507
  %v509 = vpop.f32.mrb[0].mxu0
  %510 = vmatprep.mubr.bf16.mxu0 %v265
  %511 = vmatmul.mubr.bf16.gmra.mrb[0].mxu0 %v264
  %v512 = vpop.f32.mrb[0].mxu0
  %v513 = vadd.f32 0.0, %v512
  %v514 = vpop.f32.mrb[0].mxu0
  %v515 = vpop.f32.mrb[0].mxu0
  %v516 = vadd.f32 0.0, %v515
  %v517 = vpop.f32.mrb[0].mxu0
  %518 = vmatprep.mubr.bf16.mxu0 %v267
  %519 = vmatmul.mubr.bf16.gmra.mrb[0].mxu0 %v266
  %v520 = vpop.f32.mrb[0].mxu0
  %v521 = vadd.f32 0.0, %v520
  %v522 = vpop.f32.mrb[0].mxu0
  %v523 = vpop.f32.mrb[0].mxu0
  %v524 = vadd.f32 0.0, %v523
  %v525 = vpop.f32.mrb[0].mxu0
  %526 = vmatprep.mubr.bf16.mxu0 %v269
  %527 = vmatmul.mubr.bf16.gmra.mrb[0].mxu0 %v268
  %v528 = vpop.f32.mrb[0].mxu0
  %v529 = vadd.f32 0.0, %v528
  %v530 = vpop.f32.mrb[0].mxu0
  %v531 = vpop.f32.mrb[0].mxu0
  %v532 = vadd.f32 0.0, %v531
  %v533 = vpop.f32.mrb[0].mxu0
  %534 = vmatprep.mubr.bf16.mxu0 %v271
  %535 = vmatmul.mubr.bf16.gmra.mrb[0].mxu0 %v270
  %v536 = vpop.f32.mrb[0].mxu0
  %v537 = vadd.f32 0.0, %v536
  %v538 = vpop.f32.mrb[0].mxu0
  %v539 = vpop.f32.mrb[0].mxu0
  %v540 = vadd.f32 0.0, %v539
  %v541 = vpop.f32.mrb[0].mxu0
  %542 = vmatprep.mubr.bf16.mxu0 %v273
  %543 = vmatmul.mubr.bf16.gmra.mrb[0].mxu0 %v272
  %v544 = vpop.f32.mrb[0].mxu0
  %v545 = vadd.f32 0.0, %v544
  %v546 = vpop.f32.mrb[0].mxu0
  %v547 = vpop.f32.mrb[0].mxu0
  %v548 = vadd.f32 0.0, %v547
  %v549 = vpop.f32.mrb[0].mxu0
  %550 = vmatprep.mubr.bf16.mxu0 %v275
  %551 = vmatmul.mubr.bf16.gmra.mrb[0].mxu0 %v274
  %v552 = vpop.f32.mrb[0].mxu0
  %v553 = vadd.f32 0.0, %v552
  %v554 = vpop.f32.mrb[0].mxu0
  %v555 = vpop.f32.mrb[0].mxu0
  %v556 = vadd.f32 0.0, %v555
  %v557 = vpop.f32.mrb[0].mxu0
  %558 = vmatprep.mubr.bf16.mxu0 %v277
  %559 = vmatmul.mubr.bf16.gmra.mrb[0].mxu0 %v276
  %v560 = vpop.f32.mrb[0].mxu0
  %v561 = vadd.f32 0.0, %v560
  %v562 = vpop.f32.mrb[0].mxu0
  %v563 = vpop.f32.mrb[0].mxu0
  %v564 = vadd.f32 0.0, %v563
  %v565 = vpop.f32.mrb[0].mxu0
  %566 = vdwg.mxu0
  %v567 = vadd.f32 %v54, %v441
  %v568 = vadd.f32 %v55, %v444
  %v569 = vadd.f32 %v56, %v449
  %v570 = vadd.f32 %v57, %v452
  %v571 = vadd.f32 %v58, %v457
  %v572 = vadd.f32 %v59, %v460
  %v573 = vadd.f32 %v60, %v465
  %v574 = vadd.f32 %v61, %v468
  %v575 = vadd.f32 %v62, %v473
  %v576 = vadd.f32 %v63, %v476
  %v577 = vadd.f32 %v64, %v481
  %v578 = vadd.f32 %v65, %v484
  %v579 = vadd.f32 %v66, %v489
  %v580 = vadd.f32 %v67, %v492
  %v581 = vadd.f32 %v68, %v497
  %v582 = vadd.f32 %v69, %v500
  %v583 = vadd.f32 %v70, %v505
  %v584 = vadd.f32 %v71, %v508
  %v585 = vadd.f32 %v72, %v513
  %v586 = vadd.f32 %v73, %v516
  %v587 = vadd.f32 %v74, %v521
  %v588 = vadd.f32 %v75, %v524
  %v589 = vadd.f32 %v76, %v529
  %v590 = vadd.f32 %v77, %v532
  %v591 = vadd.f32 %v78, %v537
  %v592 = vadd.f32 %v79, %v540
  %v593 = vadd.f32 %v80, %v545
  %v594 = vadd.f32 %v81, %v548
  %v595 = vadd.f32 %v82, %v553
  %v596 = vadd.f32 %v83, %v556
  %v597 = vadd.f32 %v84, %v561
  %v598 = vadd.f32 %v85, %v564
  %599 = vst [vmem:[#allocation2] sm:$0xff] %v567
  %600 = vst [vmem:[#allocation2 + $0x8] sm:$0xff] %v568
  %601 = vst [vmem:[#allocation2 + $0x10] sm:$0xff] %v569
  %602 = vst [vmem:[#allocation2 + $0x18] sm:$0xff] %v570
  %603 = vst [vmem:[#allocation2 + $0x20] sm:$0xff] %v571
  %604 = vst [vmem:[#allocation2 + $0x28] sm:$0xff] %v572
  %605 = vst [vmem:[#allocation2 + $0x30] sm:$0xff] %v573
  %606 = vst [vmem:[#allocation2 + $0x38] sm:$0xff] %v574
  %607 = vst [vmem:[#allocation2 + $0x40] sm:$0xff] %v575
  %608 = vst [vmem:[#allocation2 + $0x48] sm:$0xff] %v576
  %609 = vst [vmem:[#allocation2 + $0x50] sm:$0xff] %v577
  %610 = vst [vmem:[#allocation2 + $0x58] sm:$0xff] %v578
  %611 = vst [vmem:[#allocation2 + $0x60] sm:$0xff] %v579
  %612 = vst [vmem:[#allocation2 + $0x68] sm:$0xff] %v580
  %613 = vst [vmem:[#allocation2 + $0x70] sm:$0xff] %v581
  %614 = vst [vmem:[#allocation2 + $0x78] sm:$0xff] %v582
  %615 = vst [vmem:[#allocation2 + $0x80] sm:$0xff] %v583
  %616 = vst [vmem:[#allocation2 + $0x88] sm:$0xff] %v584
  %617 = vst [vmem:[#allocation2 + $0x90] sm:$0xff] %v585
  %618 = vst [vmem:[#allocation2 + $0x98] sm:$0xff] %v586
  %619 = vst [vmem:[#allocation2 + $0xa0] sm:$0xff] %v587
  %620 = vst [vmem:[#allocation2 + $0xa8] sm:$0xff] %v588
  %621 = vst [vmem:[#allocation2 + $0xb0] sm:$0xff] %v589
  %622 = vst [vmem:[#allocation2 + $0xb8] sm:$0xff] %v590
  %623 = vst [vmem:[#allocation2 + $0xc0] sm:$0xff] %v591
  %624 = vst [vmem:[#allocation2 + $0xc8] sm:$0xff] %v592
  %625 = vst [vmem:[#allocation2 + $0xd0] sm:$0xff] %v593
  %626 = vst [vmem:[#allocation2 + $0xd8] sm:$0xff] %v594
  %627 = vst [vmem:[#allocation2 + $0xe0] sm:$0xff] %v595
  %628 = vst [vmem:[#allocation2 + $0xe8] sm:$0xff] %v596
  %629 = vst [vmem:[#allocation2 + $0xf0] sm:$0xff] %v597
  %630 = vst [vmem:[#allocation2 + $0xf8] sm:$0xff] %v598
  // Predicated region
  $region22: #{contrastive_gnn_forward.5} parent=0 // pred_check
    %p631 = pneg %p18
  $region23: #{contrastive_gnn_forward.5} parent=0 // pred_check_branch
    %633 = sbr.rel (%p631) target = $region25
  $region24: #{contrastive_gnn_forward.5} parent=0 // pred_region
    %v634 = vld [vmem:[#allocation2] sm:$0xff]
    %v635 = vld [vmem:[#allocation2 + $0x8] sm:$0xff]
    %v636 = vld [vmem:[#allocation2 + $0x10] sm:$0xff]
    %v637 = vld [vmem:[#allocation2 + $0x18] sm:$0xff]
    %v638 = vld [vmem:[#allocation2 + $0x20] sm:$0xff]
    %v639 = vld [vmem:[#allocation2 + $0x28] sm:$0xff]
    %v640 = vld [vmem:[#allocation2 + $0x30] sm:$0xff]
    %v641 = vld [vmem:[#allocation2 + $0x38] sm:$0xff]
    %v642 = vld [vmem:[#allocation2 + $0x40] sm:$0xff]
    %v643 = vld [vmem:[#allocation2 + $0x48] sm:$0xff]
    %v644 = vld [vmem:[#allocation2 + $0x50] sm:$0xff]
    %v645 = vld [vmem:[#allocation2 + $0x58] sm:$0xff]
    %v646 = vld [vmem:[#allocation2 + $0x60] sm:$0xff]
    %v647 = vld [vmem:[#allocation2 + $0x68] sm:$0xff]
    %v648 = vld [vmem:[#allocation2 + $0x70] sm:$0xff]
    %v649 = vld [vmem:[#allocation2 + $0x78] sm:$0xff]
    %v650 = vld [vmem:[#allocation2 + $0x80] sm:$0xff]
    %v651 = vld [vmem:[#allocation2 + $0x88] sm:$0xff]
    %v652 = vld [vmem:[#allocation2 + $0x90] sm:$0xff]
    %v653 = vld [vmem:[#allocation2 + $0x98] sm:$0xff]
    %v654 = vld [vmem:[#allocation2 + $0xa0] sm:$0xff]
    %v655 = vld [vmem:[#allocation2 + $0xa8] sm:$0xff]
    %v656 = vld [vmem:[#allocation2 + $0xb0] sm:$0xff]
    %v657 = vld [vmem:[#allocation2 + $0xb8] sm:$0xff]
    %v658 = vld [vmem:[#allocation2 + $0xc0] sm:$0xff]
    %v659 = vld [vmem:[#allocation2 + $0xc8] sm:$0xff]
    %v660 = vld [vmem:[#allocation2 + $0xd0] sm:$0xff]
    %v661 = vld [vmem:[#allocation2 + $0xd8] sm:$0xff]
    %v662 = vld [vmem:[#allocation2 + $0xe0] sm:$0xff]
    %v663 = vld [vmem:[#allocation2 + $0xe8] sm:$0xff]
    %v664 = vld [vmem:[#allocation2 + $0xf0] sm:$0xff]
    %v665 = vld [vmem:[#allocation2 + $0xf8] sm:$0xff]
    %v666 = vpack.c.bf16 %v635, %v634
    %v667 = vpack.c.bf16 %v637, %v636
    %v668 = vpack.c.bf16 %v639, %v638
    %v669 = vpack.c.bf16 %v641, %v640
    %v670 = vpack.c.bf16 %v643, %v642
    %v671 = vpack.c.bf16 %v645, %v644
    %v672 = vpack.c.bf16 %v647, %v646
    %v673 = vpack.c.bf16 %v649, %v648
    %v674 = vpack.c.bf16 %v651, %v650
    %v675 = vpack.c.bf16 %v653, %v652
    %v676 = vpack.c.bf16 %v655, %v654
    %v677 = vpack.c.bf16 %v657, %v656
    %v678 = vpack.c.bf16 %v659, %v658
    %v679 = vpack.c.bf16 %v661, %v660
    %v680 = vpack.c.bf16 %v663, %v662
    %v681 = vpack.c.bf16 %v665, %v664
    %v682 = vld [vmem:[%s2] sm:$0xf]
    %v683 = vld [vmem:[%s2 + $0x4] sm:$0xf]
    %v684 = vld [vmem:[%s2 + $0x8] sm:$0xf]
    %v685 = vld [vmem:[%s2 + $0xc] sm:$0xf]
    %v686 = vld [vmem:[%s2 + $0x10] sm:$0xf]
    %v687 = vld [vmem:[%s2 + $0x14] sm:$0xf]
    %v688 = vld [vmem:[%s2 + $0x18] sm:$0xf]
    %v689 = vld [vmem:[%s2 + $0x1c] sm:$0xf]
    %v690 = vld [vmem:[%s2 + $0x20] sm:$0xf]
    %v691 = vld [vmem:[%s2 + $0x24] sm:$0xf]
    %v692 = vld [vmem:[%s2 + $0x28] sm:$0xf]
    %v693 = vld [vmem:[%s2 + $0x2c] sm:$0xf]
    %v694 = vld [vmem:[%s2 + $0x30] sm:$0xf]
    %v695 = vld [vmem:[%s2 + $0x34] sm:$0xf]
    %v696 = vld [vmem:[%s2 + $0x38] sm:$0xf]
    %v697 = vld [vmem:[%s2 + $0x3c] sm:$0xf]
    %v698 = vld [vmem:[%s3] sm:$0x1]
    %v700 = vlaneseq
    %v701 = vshrl.u32 %v700, 7
    %v702 = vsub.s32 0, %v701
    %v703 = vrot.slane %v698, %v702
    %v721 = vunpack.c.l.b16 %v682
    %v722 = vunpack.c.l.b16 %v683
    %v723 = vunpack.c.l.b16 %v684
    %v724 = vunpack.c.l.b16 %v685
    %v725 = vunpack.c.l.b16 %v686
    %v726 = vunpack.c.l.b16 %v687
    %v727 = vunpack.c.l.b16 %v688
    %v728 = vunpack.c.l.b16 %v689
    %v729 = vunpack.c.l.b16 %v690
    %v730 = vunpack.c.l.b16 %v691
    %v731 = vunpack.c.l.b16 %v692
    %v732 = vunpack.c.l.b16 %v693
    %v733 = vunpack.c.l.b16 %v694
    %v734 = vunpack.c.l.b16 %v695
    %v735 = vunpack.c.l.b16 %v696
    %v736 = vunpack.c.l.b16 %v697
    %v737 = vpack.c.b16 %v722, %v721
    %v738 = vpack.c.b16 %v724, %v723
    %v739 = vpack.c.b16 %v726, %v725
    %v740 = vpack.c.b16 %v728, %v727
    %v741 = vpack.c.b16 %v730, %v729
    %v742 = vpack.c.b16 %v732, %v731
    %v743 = vpack.c.b16 %v734, %v733
    %v744 = vpack.c.b16 %v736, %v735
    %753 = vmatprep.subr.bf16.mxu0 0
    %754 = vmatpush1.bf16.msra.mxu0 %v737
    %755 = vmatprep.subr.bf16.mxu0 0
    %756 = vmatpush1.bf16.msra.mxu0 %v738
    %757 = vmatprep.subr.bf16.mxu0 0
    %758 = vmatpush1.bf16.msra.mxu0 %v739
    %759 = vmatprep.subr.bf16.mxu0 0
    %760 = vmatpush1.bf16.msra.mxu0 %v740
    %761 = vmatprep.subr.bf16.mxu0 0
    %762 = vmatpush1.bf16.msra.mxu0 %v741
    %763 = vmatprep.subr.bf16.mxu0 0
    %764 = vmatpush1.bf16.msra.mxu0 %v742
    %765 = vmatprep.subr.bf16.mxu0 0
    %766 = vmatpush1.bf16.msra.mxu0 %v743
    %767 = vmatprep.subr.bf16.mxu0 0
    %768 = vmatpush1.bf16.msra.mxu0 %v744
    %769 = vmatprep.subr.bf16.mxu0 0
    %770 = vmatpush1.bf16.msra.mxu0 0
    %771 = vmatprep.subr.bf16.mxu0 0
    %772 = vmatpush1.bf16.msra.mxu0 0
    %773 = vmatprep.subr.bf16.mxu0 0
    %774 = vmatpush1.bf16.msra.mxu0 0
    %775 = vmatprep.subr.bf16.mxu0 0
    %776 = vmatpush1.bf16.msra.mxu0 0
    %777 = vmatprep.subr.bf16.mxu0 0
    %778 = vmatpush1.bf16.msra.mxu0 0
    %779 = vmatprep.subr.bf16.mxu0 0
    %780 = vmatpush1.bf16.msra.mxu0 0
    %781 = vmatprep.subr.bf16.mxu0 0
    %782 = vmatpush1.bf16.msra.mxu0 0
    %783 = vmatprep.subr.bf16.mxu0 0
    %784 = vmatpush1.bf16.msra.mxu0 0
    %785 = vmatprep.mubr.bf16.mxu0 0
    %786 = vmatmul.mubr.bf16.gmra.mrb[0].mxu0 %v666
    %v787 = vpop.f32.mrb[0].mxu0
    %v788 = vadd.f32 %v703, %v787
    %v789 = vpop.f32.mrb[0].mxu0
    %v790 = vpop.f32.mrb[0].mxu0
    %v791 = vadd.f32 %v703, %v790
    %v792 = vpop.f32.mrb[0].mxu0
    %793 = vmatprep.mubr.bf16.mxu0 0
    %794 = vmatmul.mubr.bf16.gmra.mrb[0].mxu0 %v667
    %v795 = vpop.f32.mrb[0].mxu0
    %v796 = vadd.f32 %v703, %v795
    %v797 = vpop.f32.mrb[0].mxu0
    %v798 = vpop.f32.mrb[0].mxu0
    %v799 = vadd.f32 %v703, %v798
    %v800 = vpop.f32.mrb[0].mxu0
    %801 = vmatprep.mubr.bf16.mxu0 0
    %802 = vmatmul.mubr.bf16.gmra.mrb[0].mxu0 %v668
    %v803 = vpop.f32.mrb[0].mxu0
    %v804 = vadd.f32 %v703, %v803
    %v805 = vpop.f32.mrb[0].mxu0
    %v806 = vpop.f32.mrb[0].mxu0
    %v807 = vadd.f32 %v703, %v806
    %v808 = vpop.f32.mrb[0].mxu0
    %809 = vmatprep.mubr.bf16.mxu0 0
    %810 = vmatmul.mubr.bf16.gmra.mrb[0].mxu0 %v669
    %v811 = vpop.f32.mrb[0].mxu0
    %v812 = vadd.f32 %v703, %v811
    %v813 = vpop.f32.mrb[0].mxu0
    %v814 = vpop.f32.mrb[0].mxu0
    %v815 = vadd.f32 %v703, %v814
    %v816 = vpop.f32.mrb[0].mxu0
    %817 = vmatprep.mubr.bf16.mxu0 0
    %818 = vmatmul.mubr.bf16.gmra.mrb[0].mxu0 %v670
    %v819 = vpop.f32.mrb[0].mxu0
    %v820 = vadd.f32 %v703, %v819
    %v821 = vpop.f32.mrb[0].mxu0
    %v822 = vpop.f32.mrb[0].mxu0
    %v823 = vadd.f32 %v703, %v822
    %v824 = vpop.f32.mrb[0].mxu0
    %825 = vmatprep.mubr.bf16.mxu0 0
    %826 = vmatmul.mubr.bf16.gmra.mrb[0].mxu0 %v671
    %v827 = vpop.f32.mrb[0].mxu0
    %v828 = vadd.f32 %v703, %v827
    %v829 = vpop.f32.mrb[0].mxu0
    %v830 = vpop.f32.mrb[0].mxu0
    %v831 = vadd.f32 %v703, %v830
    %v832 = vpop.f32.mrb[0].mxu0
    %833 = vmatprep.mubr.bf16.mxu0 0
    %834 = vmatmul.mubr.bf16.gmra.mrb[0].mxu0 %v672
    %v835 = vpop.f32.mrb[0].mxu0
    %v836 = vadd.f32 %v703, %v835
    %v837 = vpop.f32.mrb[0].mxu0
    %v838 = vpop.f32.mrb[0].mxu0
    %v839 = vadd.f32 %v703, %v838
    %v840 = vpop.f32.mrb[0].mxu0
    %841 = vmatprep.mubr.bf16.mxu0 0
    %842 = vmatmul.mubr.bf16.gmra.mrb[0].mxu0 %v673
    %v843 = vpop.f32.mrb[0].mxu0
    %v844 = vadd.f32 %v703, %v843
    %v845 = vpop.f32.mrb[0].mxu0
    %v846 = vpop.f32.mrb[0].mxu0
    %v847 = vadd.f32 %v703, %v846
    %v848 = vpop.f32.mrb[0].mxu0
    %849 = vmatprep.mubr.bf16.mxu0 0
    %850 = vmatmul.mubr.bf16.gmra.mrb[0].mxu0 %v674
    %v851 = vpop.f32.mrb[0].mxu0
    %v852 = vadd.f32 %v703, %v851
    %v853 = vpop.f32.mrb[0].mxu0
    %v854 = vpop.f32.mrb[0].mxu0
    %v855 = vadd.f32 %v703, %v854
    %v856 = vpop.f32.mrb[0].mxu0
    %857 = vmatprep.mubr.bf16.mxu0 0
    %858 = vmatmul.mubr.bf16.gmra.mrb[0].mxu0 %v675
    %v859 = vpop.f32.mrb[0].mxu0
    %v860 = vadd.f32 %v703, %v859
    %v861 = vpop.f32.mrb[0].mxu0
    %v862 = vpop.f32.mrb[0].mxu0
    %v863 = vadd.f32 %v703, %v862
    %v864 = vpop.f32.mrb[0].mxu0
    %865 = vmatprep.mubr.bf16.mxu0 0
    %866 = vmatmul.mubr.bf16.gmra.mrb[0].mxu0 %v676
    %v867 = vpop.f32.mrb[0].mxu0
    %v868 = vadd.f32 %v703, %v867
    %v869 = vpop.f32.mrb[0].mxu0
    %v870 = vpop.f32.mrb[0].mxu0
    %v871 = vadd.f32 %v703, %v870
    %v872 = vpop.f32.mrb[0].mxu0
    %873 = vmatprep.mubr.bf16.mxu0 0
    %874 = vmatmul.mubr.bf16.gmra.mrb[0].mxu0 %v677
    %v875 = vpop.f32.mrb[0].mxu0
    %v876 = vadd.f32 %v703, %v875
    %v877 = vpop.f32.mrb[0].mxu0
    %v878 = vpop.f32.mrb[0].mxu0
    %v879 = vadd.f32 %v703, %v878
    %v880 = vpop.f32.mrb[0].mxu0
    %881 = vmatprep.mubr.bf16.mxu0 0
    %882 = vmatmul.mubr.bf16.gmra.mrb[0].mxu0 %v678
    %v883 = vpop.f32.mrb[0].mxu0
    %v884 = vadd.f32 %v703, %v883
    %v885 = vpop.f32.mrb[0].mxu0
    %v886 = vpop.f32.mrb[0].mxu0
    %v887 = vadd.f32 %v703, %v886
    %v888 = vpop.f32.mrb[0].mxu0
    %889 = vmatprep.mubr.bf16.mxu0 0
    %890 = vmatmul.mubr.bf16.gmra.mrb[0].mxu0 %v679
    %v891 = vpop.f32.mrb[0].mxu0
    %v892 = vadd.f32 %v703, %v891
    %v893 = vpop.f32.mrb[0].mxu0
    %v894 = vpop.f32.mrb[0].mxu0
    %v895 = vadd.f32 %v703, %v894
    %v896 = vpop.f32.mrb[0].mxu0
    %897 = vmatprep.mubr.bf16.mxu0 0
    %898 = vmatmul.mubr.bf16.gmra.mrb[0].mxu0 %v680
    %v899 = vpop.f32.mrb[0].mxu0
    %v900 = vadd.f32 %v703, %v899
    %v901 = vpop.f32.mrb[0].mxu0
    %v902 = vpop.f32.mrb[0].mxu0
    %v903 = vadd.f32 %v703, %v902
    %v904 = vpop.f32.mrb[0].mxu0
    %905 = vmatprep.mubr.bf16.mxu0 0
    %906 = vmatmul.mubr.bf16.gmra.mrb[0].mxu0 %v681
    %v907 = vpop.f32.mrb[0].mxu0
    %v908 = vadd.f32 %v703, %v907
    %v909 = vpop.f32.mrb[0].mxu0
    %v910 = vpop.f32.mrb[0].mxu0
    %v911 = vadd.f32 %v703, %v910
    %v912 = vpop.f32.mrb[0].mxu0
    %913 = vdwg.mxu0
    %914 = vst [vmem:[%s4] sm:$0xff] %v788
    %915 = vst [vmem:[%s4 + $0x8] sm:$0xff] %v791
    %916 = vst [vmem:[%s4 + $0x10] sm:$0xff] %v796
    %917 = vst [vmem:[%s4 + $0x18] sm:$0xff] %v799
    %918 = vst [vmem:[%s4 + $0x20] sm:$0xff] %v804
    %919 = vst [vmem:[%s4 + $0x28] sm:$0xff] %v807
    %920 = vst [vmem:[%s4 + $0x30] sm:$0xff] %v812
    %921 = vst [vmem:[%s4 + $0x38] sm:$0xff] %v815
    %922 = vst [vmem:[%s4 + $0x40] sm:$0xff] %v820
    %923 = vst [vmem:[%s4 + $0x48] sm:$0xff] %v823
    %924 = vst [vmem:[%s4 + $0x50] sm:$0xff] %v828
    %925 = vst [vmem:[%s4 + $0x58] sm:$0xff] %v831
    %926 = vst [vmem:[%s4 + $0x60] sm:$0xff] %v836
    %927 = vst [vmem:[%s4 + $0x68] sm:$0xff] %v839
    %928 = vst [vmem:[%s4 + $0x70] sm:$0xff] %v844
    %929 = vst [vmem:[%s4 + $0x78] sm:$0xff] %v847
    %930 = vst [vmem:[%s4 + $0x80] sm:$0xff] %v852
    %931 = vst [vmem:[%s4 + $0x88] sm:$0xff] %v855
    %932 = vst [vmem:[%s4 + $0x90] sm:$0xff] %v860
    %933 = vst [vmem:[%s4 + $0x98] sm:$0xff] %v863
    %934 = vst [vmem:[%s4 + $0xa0] sm:$0xff] %v868
    %935 = vst [vmem:[%s4 + $0xa8] sm:$0xff] %v871
    %936 = vst [vmem:[%s4 + $0xb0] sm:$0xff] %v876
    %937 = vst [vmem:[%s4 + $0xb8] sm:$0xff] %v879
    %938 = vst [vmem:[%s4 + $0xc0] sm:$0xff] %v884
    %939 = vst [vmem:[%s4 + $0xc8] sm:$0xff] %v887
    %940 = vst [vmem:[%s4 + $0xd0] sm:$0xff] %v892
    %941 = vst [vmem:[%s4 + $0xd8] sm:$0xff] %v895
    %942 = vst [vmem:[%s4 + $0xe0] sm:$0xff] %v900
    %943 = vst [vmem:[%s4 + $0xe8] sm:$0xff] %v903
    %944 = vst [vmem:[%s4 + $0xf0] sm:$0xff] %v908
    %945 = vst [vmem:[%s4 + $0xf8] sm:$0xff] %v911
  $region25: #{contrastive_gnn_forward.5} parent=0 // pred_fallthru
    _
  // Predicated region
  $region26: #{contrastive_gnn_forward.5} parent=0 // pred_check
    _
  $region27: #{contrastive_gnn_forward.5} parent=0 // pred_check_branch
    %947 = sbr.rel (0) target = $region29
  $region28: #{contrastive_gnn_forward.5} parent=0 // pred_region
    _
  $region29: #{contrastive_gnn_forward.5} parent=0 // pred_fallthru
    _
  // Predicated region
  $region30: #{contrastive_gnn_forward.5} parent=0 // pred_check
    _
  $region31: #{contrastive_gnn_forward.5} parent=0 // pred_check_branch
    %949 = sbr.rel (0) target = $region33
  $region32: #{contrastive_gnn_forward.5} parent=0 // pred_region
    _
  $region33: #{contrastive_gnn_forward.5} parent=0 // pred_fallthru
    _

// kernel: contrastive_gnn_forward.3
$region0: #{contrastive_gnn_forward.3}
  #allocation0 [shape = 'u32[]', space=smem, size = 0x4, offset = 0x4, fixed_abs, tag = 'smem constant byte address 0x4 - core index']
  #allocation1 [shape = 'u32[144,128]{1,0:T(1,128)}', space=vmem, size = 0x12000, scoped, tag = 'internal scratch']
  #allocation2 [shape = 'f32[256,128]{1,0:T(8,128)}', space=vmem, size = 0x20000, scoped, tag = 'scratch operand']
  %s0 = inlined_call_operand.vmem [shape: bf16[256,256], index: 0, kind: input, shape index: {}]
  %s1 = inlined_call_operand.vmem [shape: bf16[256,128], index: 1, kind: input, shape index: {}]
  %s2 = inlined_call_operand.vmem [shape: bf16[128,128], index: 2, kind: input, shape index: {}]
  %s3 = inlined_call_operand.vmem [shape: f32[1,128], index: 3, kind: input, shape index: {}]
  %s4 = inlined_call_operand.vmem [shape: bf16[256,128], index: 4, kind: output, shape index: {}]
  %s5 = sld [smem:[#allocation0]]
  $region34: #{contrastive_gnn_forward.3} parent=0
    _
  %s7 = ssub.s32 1, %s5
  %s8 = scalar_select 0, %s7, %s5
  // Predicated region
  $region2: #{contrastive_gnn_forward.3} parent=0 // pred_check
    _
  $region3: #{contrastive_gnn_forward.3} parent=0 // pred_check_branch
    %10 = sbr.rel (0) target = $region5
  $region4: #{contrastive_gnn_forward.3} parent=0 // pred_region
    _
  $region5: #{contrastive_gnn_forward.3} parent=0 // pred_fallthru
    _
  // Predicated region
  $region6: #{contrastive_gnn_forward.3} parent=0 // pred_check
    _
  $region7: #{contrastive_gnn_forward.3} parent=0 // pred_check_branch
    %12 = sbr.rel (0) target = $region9
  $region8: #{contrastive_gnn_forward.3} parent=0 // pred_region
    _
  $region9: #{contrastive_gnn_forward.3} parent=0 // pred_fallthru
    _
  // Predicated region
  $region10: #{contrastive_gnn_forward.3} parent=0 // pred_check
    _
  $region11: #{contrastive_gnn_forward.3} parent=0 // pred_check_branch
    %14 = sbr.rel (0) target = $region13
  $region12: #{contrastive_gnn_forward.3} parent=0 // pred_region
    _
  $region13: #{contrastive_gnn_forward.3} parent=0 // pred_fallthru
    _
  // Predicated region
  $region14: #{contrastive_gnn_forward.3} parent=0 // pred_check
    _
  $region15: #{contrastive_gnn_forward.3} parent=0 // pred_check_branch
    %16 = sbr.rel (0) target = $region17
  $region16: #{contrastive_gnn_forward.3} parent=0 // pred_region
    _
  $region17: #{contrastive_gnn_forward.3} parent=0 // pred_fallthru
    _
  %p18 = scmp.eq.s32.totalorder 0, 0
  // Predicated region
  $region18: #{contrastive_gnn_forward.3} parent=0 // pred_check
    %p19 = pneg %p18
  $region19: #{contrastive_gnn_forward.3} parent=0 // pred_check_branch
    %21 = sbr.rel (%p19) target = $region21
  $region20: #{contrastive_gnn_forward.3} parent=0 // pred_region
    %22 = vst [vmem:[#allocation2] sm:$0xff] 0.0
    %23 = vst [vmem:[#allocation2 + $0x8] sm:$0xff] 0.0
    %24 = vst [vmem:[#allocation2 + $0x10] sm:$0xff] 0.0
    %25 = vst [vmem:[#allocation2 + $0x18] sm:$0xff] 0.0
    %26 = vst [vmem:[#allocation2 + $0x20] sm:$0xff] 0.0
    %27 = vst [vmem:[#allocation2 + $0x28] sm:$0xff] 0.0
    %28 = vst [vmem:[#allocation2 + $0x30] sm:$0xff] 0.0
    %29 = vst [vmem:[#allocation2 + $0x38] sm:$0xff] 0.0
    %30 = vst [vmem:[#allocation2 + $0x40] sm:$0xff] 0.0
    %31 = vst [vmem:[#allocation2 + $0x48] sm:$0xff] 0.0
    %32 = vst [vmem:[#allocation2 + $0x50] sm:$0xff] 0.0
    %33 = vst [vmem:[#allocation2 + $0x58] sm:$0xff] 0.0
    %34 = vst [vmem:[#allocation2 + $0x60] sm:$0xff] 0.0
    %35 = vst [vmem:[#allocation2 + $0x68] sm:$0xff] 0.0
    %36 = vst [vmem:[#allocation2 + $0x70] sm:$0xff] 0.0
    %37 = vst [vmem:[#allocation2 + $0x78] sm:$0xff] 0.0
    %38 = vst [vmem:[#allocation2 + $0x80] sm:$0xff] 0.0
    %39 = vst [vmem:[#allocation2 + $0x88] sm:$0xff] 0.0
    %40 = vst [vmem:[#allocation2 + $0x90] sm:$0xff] 0.0
    %41 = vst [vmem:[#allocation2 + $0x98] sm:$0xff] 0.0
    %42 = vst [vmem:[#allocation2 + $0xa0] sm:$0xff] 0.0
    %43 = vst [vmem:[#allocation2 + $0xa8] sm:$0xff] 0.0
    %44 = vst [vmem:[#allocation2 + $0xb0] sm:$0xff] 0.0
    %45 = vst [vmem:[#allocation2 + $0xb8] sm:$0xff] 0.0
    %46 = vst [vmem:[#allocation2 + $0xc0] sm:$0xff] 0.0
    %47 = vst [vmem:[#allocation2 + $0xc8] sm:$0xff] 0.0
    %48 = vst [vmem:[#allocation2 + $0xd0] sm:$0xff] 0.0
    %49 = vst [vmem:[#allocation2 + $0xd8] sm:$0xff] 0.0
    %50 = vst [vmem:[#allocation2 + $0xe0] sm:$0xff] 0.0
    %51 = vst [vmem:[#allocation2 + $0xe8] sm:$0xff] 0.0
    %52 = vst [vmem:[#allocation2 + $0xf0] sm:$0xff] 0.0
    %53 = vst [vmem:[#allocation2 + $0xf8] sm:$0xff] 0.0
  $region21: #{contrastive_gnn_forward.3} parent=0 // pred_fallthru
    _
  %v54 = vld [vmem:[#allocation2] sm:$0xff]
  %v55 = vld [vmem:[#allocation2 + $0x8] sm:$0xff]
  %v56 = vld [vmem:[#allocation2 + $0x10] sm:$0xff]
  %v57 = vld [vmem:[#allocation2 + $0x18] sm:$0xff]
  %v58 = vld [vmem:[#allocation2 + $0x20] sm:$0xff]
  %v59 = vld [vmem:[#allocation2 + $0x28] sm:$0xff]
  %v60 = vld [vmem:[#allocation2 + $0x30] sm:$0xff]
  %v61 = vld [vmem:[#allocation2 + $0x38] sm:$0xff]
  %v62 = vld [vmem:[#allocation2 + $0x40] sm:$0xff]
  %v63 = vld [vmem:[#allocation2 + $0x48] sm:$0xff]
  %v64 = vld [vmem:[#allocation2 + $0x50] sm:$0xff]
  %v65 = vld [vmem:[#allocation2 + $0x58] sm:$0xff]
  %v66 = vld [vmem:[#allocation2 + $0x60] sm:$0xff]
  %v67 = vld [vmem:[#allocation2 + $0x68] sm:$0xff]
  %v68 = vld [vmem:[#allocation2 + $0x70] sm:$0xff]
  %v69 = vld [vmem:[#allocation2 + $0x78] sm:$0xff]
  %v70 = vld [vmem:[#allocation2 + $0x80] sm:$0xff]
  %v71 = vld [vmem:[#allocation2 + $0x88] sm:$0xff]
  %v72 = vld [vmem:[#allocation2 + $0x90] sm:$0xff]
  %v73 = vld [vmem:[#allocation2 + $0x98] sm:$0xff]
  %v74 = vld [vmem:[#allocation2 + $0xa0] sm:$0xff]
  %v75 = vld [vmem:[#allocation2 + $0xa8] sm:$0xff]
  %v76 = vld [vmem:[#allocation2 + $0xb0] sm:$0xff]
  %v77 = vld [vmem:[#allocation2 + $0xb8] sm:$0xff]
  %v78 = vld [vmem:[#allocation2 + $0xc0] sm:$0xff]
  %v79 = vld [vmem:[#allocation2 + $0xc8] sm:$0xff]
  %v80 = vld [vmem:[#allocation2 + $0xd0] sm:$0xff]
  %v81 = vld [vmem:[#allocation2 + $0xd8] sm:$0xff]
  %v82 = vld [vmem:[#allocation2 + $0xe0] sm:$0xff]
  %v83 = vld [vmem:[#allocation2 + $0xe8] sm:$0xff]
  %v84 = vld [vmem:[#allocation2 + $0xf0] sm:$0xff]
  %v85 = vld [vmem:[#allocation2 + $0xf8] sm:$0xff]
  %v86 = vld [vmem:[%s0] sm:$0xff]
  %v87 = vld [vmem:[%s0 + $0x8] sm:$0xff]
  %v88 = vld [vmem:[%s0 + $0x10] sm:$0xff]
  %v89 = vld [vmem:[%s0 + $0x18] sm:$0xff]
  %v90 = vld [vmem:[%s0 + $0x20] sm:$0xff]
  %v91 = vld [vmem:[%s0 + $0x28] sm:$0xff]
  %v92 = vld [vmem:[%s0 + $0x30] sm:$0xff]
  %v93 = vld [vmem:[%s0 + $0x38] sm:$0xff]
  %v94 = vld [vmem:[%s0 + $0x40] sm:$0xff]
  %v95 = vld [vmem:[%s0 + $0x48] sm:$0xff]
  %v96 = vld [vmem:[%s0 + $0x50] sm:$0xff]
  %v97 = vld [vmem:[%s0 + $0x58] sm:$0xff]
  %v98 = vld [vmem:[%s0 + $0x60] sm:$0xff]
  %v99 = vld [vmem:[%s0 + $0x68] sm:$0xff]
  %v100 = vld [vmem:[%s0 + $0x70] sm:$0xff]
  %v101 = vld [vmem:[%s0 + $0x78] sm:$0xff]
  %v102 = vld [vmem:[%s0 + $0x80] sm:$0xff]
  %v103 = vld [vmem:[%s0 + $0x88] sm:$0xff]
  %v104 = vld [vmem:[%s0 + $0x90] sm:$0xff]
  %v105 = vld [vmem:[%s0 + $0x98] sm:$0xff]
  %v106 = vld [vmem:[%s0 + $0xa0] sm:$0xff]
  %v107 = vld [vmem:[%s0 + $0xa8] sm:$0xff]
  %v108 = vld [vmem:[%s0 + $0xb0] sm:$0xff]
  %v109 = vld [vmem:[%s0 + $0xb8] sm:$0xff]
  %v110 = vld [vmem:[%s0 + $0xc0] sm:$0xff]
  %v111 = vld [vmem:[%s0 + $0xc8] sm:$0xff]
  %v112 = vld [vmem:[%s0 + $0xd0] sm:$0xff]
  %v113 = vld [vmem:[%s0 + $0xd8] sm:$0xff]
  %v114 = vld [vmem:[%s0 + $0xe0] sm:$0xff]
  %v115 = vld [vmem:[%s0 + $0xe8] sm:$0xff]
  %v116 = vld [vmem:[%s0 + $0xf0] sm:$0xff]
  %v117 = vld [vmem:[%s0 + $0xf8] sm:$0xff]
  %v118 = vld [vmem:[%s1] sm:$0xf]
  %v119 = vld [vmem:[%s1 + $0x4] sm:$0xf]
  %v120 = vld [vmem:[%s1 + $0x8] sm:$0xf]
  %v121 = vld [vmem:[%s1 + $0xc] sm:$0xf]
  %v122 = vld [vmem:[%s1 + $0x10] sm:$0xf]
  %v123 = vld [vmem:[%s1 + $0x14] sm:$0xf]
  %v124 = vld [vmem:[%s1 + $0x18] sm:$0xf]
  %v125 = vld [vmem:[%s1 + $0x1c] sm:$0xf]
  %v126 = vld [vmem:[%s1 + $0x20] sm:$0xf]
  %v127 = vld [vmem:[%s1 + $0x24] sm:$0xf]
  %v128 = vld [vmem:[%s1 + $0x28] sm:$0xf]
  %v129 = vld [vmem:[%s1 + $0x2c] sm:$0xf]
  %v130 = vld [vmem:[%s1 + $0x30] sm:$0xf]
  %v131 = vld [vmem:[%s1 + $0x34] sm:$0xf]
  %v132 = vld [vmem:[%s1 + $0x38] sm:$0xf]
  %v133 = vld [vmem:[%s1 + $0x3c] sm:$0xf]
  %v134 = vld [vmem:[%s1 + $0x40] sm:$0xf]
  %v135 = vld [vmem:[%s1 + $0x44] sm:$0xf]
  %v136 = vld [vmem:[%s1 + $0x48] sm:$0xf]
  %v137 = vld [vmem:[%s1 + $0x4c] sm:$0xf]
  %v138 = vld [vmem:[%s1 + $0x50] sm:$0xf]
  %v139 = vld [vmem:[%s1 + $0x54] sm:$0xf]
  %v140 = vld [vmem:[%s1 + $0x58] sm:$0xf]
  %v141 = vld [vmem:[%s1 + $0x5c] sm:$0xf]
  %v142 = vld [vmem:[%s1 + $0x60] sm:$0xf]
  %v143 = vld [vmem:[%s1 + $0x64] sm:$0xf]
  %v144 = vld [vmem:[%s1 + $0x68] sm:$0xf]
  %v145 = vld [vmem:[%s1 + $0x6c] sm:$0xf]
  %v146 = vld [vmem:[%s1 + $0x70] sm:$0xf]
  %v147 = vld [vmem:[%s1 + $0x74] sm:$0xf]
  %v148 = vld [vmem:[%s1 + $0x78] sm:$0xf]
  %v149 = vld [vmem:[%s1 + $0x7c] sm:$0xf]
  %v182 = vunpack.c.l.b16 %v86
  %v183 = vunpack.c.h.b16 %v86
  %v184 = vunpack.c.l.b16 %v87
  %v185 = vunpack.c.h.b16 %v87
  %v186 = vunpack.c.l.b16 %v88
  %v187 = vunpack.c.h.b16 %v88
  %v188 = vunpack.c.l.b16 %v89
  %v189 = vunpack.c.h.b16 %v89
  %v190 = vunpack.c.l.b16 %v90
  %v191 = vunpack.c.h.b16 %v90
  %v192 = vunpack.c.l.b16 %v91
  %v193 = vunpack.c.h.b16 %v91
  %v194 = vunpack.c.l.b16 %v92
  %v195 = vunpack.c.h.b16 %v92
  %v196 = vunpack.c.l.b16 %v93
  %v197 = vunpack.c.h.b16 %v93
  %v198 = vunpack.c.l.b16 %v94
  %v199 = vunpack.c.h.b16 %v94
  %v200 = vunpack.c.l.b16 %v95
  %v201 = vunpack.c.h.b16 %v95
  %v202 = vunpack.c.l.b16 %v96
  %v203 = vunpack.c.h.b16 %v96
  %v204 = vunpack.c.l.b16 %v97
  %v205 = vunpack.c.h.b16 %v97
  %v206 = vunpack.c.l.b16 %v98
  %v207 = vunpack.c.h.b16 %v98
  %v208 = vunpack.c.l.b16 %v99
  %v209 = vunpack.c.h.b16 %v99
  %v210 = vunpack.c.l.b16 %v100
  %v211 = vunpack.c.h.b16 %v100
  %v212 = vunpack.c.l.b16 %v101
  %v213 = vunpack.c.h.b16 %v101
  %v214 = vunpack.c.l.b16 %v102
  %v215 = vunpack.c.h.b16 %v102
  %v216 = vunpack.c.l.b16 %v103
  %v217 = vunpack.c.h.b16 %v103
  %v218 = vunpack.c.l.b16 %v104
  %v219 = vunpack.c.h.b16 %v104
  %v220 = vunpack.c.l.b16 %v105
  %v221 = vunpack.c.h.b16 %v105
  %v222 = vunpack.c.l.b16 %v106
  %v223 = vunpack.c.h.b16 %v106
  %v224 = vunpack.c.l.b16 %v107
  %v225 = vunpack.c.h.b16 %v107
  %v226 = vunpack.c.l.b16 %v108
  %v227 = vunpack.c.h.b16 %v108
  %v228 = vunpack.c.l.b16 %v109
  %v229 = vunpack.c.h.b16 %v109
  %v230 = vunpack.c.l.b16 %v110
  %v231 = vunpack.c.h.b16 %v110
  %v232 = vunpack.c.l.b16 %v111
  %v233 = vunpack.c.h.b16 %v111
  %v234 = vunpack.c.l.b16 %v112
  %v235 = vunpack.c.h.b16 %v112
  %v236 = vunpack.c.l.b16 %v113
  %v237 = vunpack.c.h.b16 %v113
  %v238 = vunpack.c.l.b16 %v114
  %v239 = vunpack.c.h.b16 %v114
  %v240 = vunpack.c.l.b16 %v115
  %v241 = vunpack.c.h.b16 %v115
  %v242 = vunpack.c.l.b16 %v116
  %v243 = vunpack.c.h.b16 %v116
  %v244 = vunpack.c.l.b16 %v117
  %v245 = vunpack.c.h.b16 %v117
  %v246 = vpack.c.b16 %v184, %v182
  %v247 = vpack.c.b16 %v185, %v183
  %v248 = vpack.c.b16 %v188, %v186
  %v249 = vpack.c.b16 %v189, %v187
  %v250 = vpack.c.b16 %v192, %v190
  %v251 = vpack.c.b16 %v193, %v191
  %v252 = vpack.c.b16 %v196, %v194
  %v253 = vpack.c.b16 %v197, %v195
  %v254 = vpack.c.b16 %v200, %v198
  %v255 = vpack.c.b16 %v201, %v199
  %v256 = vpack.c.b16 %v204, %v202
  %v257 = vpack.c.b16 %v205, %v203
  %v258 = vpack.c.b16 %v208, %v206
  %v259 = vpack.c.b16 %v209, %v207
  %v260 = vpack.c.b16 %v212, %v210
  %v261 = vpack.c.b16 %v213, %v211
  %v262 = vpack.c.b16 %v216, %v214
  %v263 = vpack.c.b16 %v217, %v215
  %v264 = vpack.c.b16 %v220, %v218
  %v265 = vpack.c.b16 %v221, %v219
  %v266 = vpack.c.b16 %v224, %v222
  %v267 = vpack.c.b16 %v225, %v223
  %v268 = vpack.c.b16 %v228, %v226
  %v269 = vpack.c.b16 %v229, %v227
  %v270 = vpack.c.b16 %v232, %v230
  %v271 = vpack.c.b16 %v233, %v231
  %v272 = vpack.c.b16 %v236, %v234
  %v273 = vpack.c.b16 %v237, %v235
  %v274 = vpack.c.b16 %v240, %v238
  %v275 = vpack.c.b16 %v241, %v239
  %v276 = vpack.c.b16 %v244, %v242
  %v277 = vpack.c.b16 %v245, %v243
  %v342 = vunpack.c.l.b16 %v118
  %v343 = vunpack.c.l.b16 %v119
  %v344 = vunpack.c.l.b16 %v120
  %v345 = vunpack.c.l.b16 %v121
  %v346 = vunpack.c.l.b16 %v122
  %v347 = vunpack.c.l.b16 %v123
  %v348 = vunpack.c.l.b16 %v124
  %v349 = vunpack.c.l.b16 %v125
  %v350 = vunpack.c.l.b16 %v126
  %v351 = vunpack.c.l.b16 %v127
  %v352 = vunpack.c.l.b16 %v128
  %v353 = vunpack.c.l.b16 %v129
  %v354 = vunpack.c.l.b16 %v130
  %v355 = vunpack.c.l.b16 %v131
  %v356 = vunpack.c.l.b16 %v132
  %v357 = vunpack.c.l.b16 %v133
  %v358 = vunpack.c.l.b16 %v134
  %v359 = vunpack.c.l.b16 %v135
  %v360 = vunpack.c.l.b16 %v136
  %v361 = vunpack.c.l.b16 %v137
  %v362 = vunpack.c.l.b16 %v138
  %v363 = vunpack.c.l.b16 %v139
  %v364 = vunpack.c.l.b16 %v140
  %v365 = vunpack.c.l.b16 %v141
  %v366 = vunpack.c.l.b16 %v142
  %v367 = vunpack.c.l.b16 %v143
  %v368 = vunpack.c.l.b16 %v144
  %v369 = vunpack.c.l.b16 %v145
  %v370 = vunpack.c.l.b16 %v146
  %v371 = vunpack.c.l.b16 %v147
  %v372 = vunpack.c.l.b16 %v148
  %v373 = vunpack.c.l.b16 %v149
  %v374 = vpack.c.b16 %v343, %v342
  %v375 = vpack.c.b16 %v345, %v344
  %v376 = vpack.c.b16 %v347, %v346
  %v377 = vpack.c.b16 %v349, %v348
  %v378 = vpack.c.b16 %v351, %v350
  %v379 = vpack.c.b16 %v353, %v352
  %v380 = vpack.c.b16 %v355, %v354
  %v381 = vpack.c.b16 %v357, %v356
  %v382 = vpack.c.b16 %v359, %v358
  %v383 = vpack.c.b16 %v361, %v360
  %v384 = vpack.c.b16 %v363, %v362
  %v385 = vpack.c.b16 %v365, %v364
  %v386 = vpack.c.b16 %v367, %v366
  %v387 = vpack.c.b16 %v369, %v368
  %v388 = vpack.c.b16 %v371, %v370
  %v389 = vpack.c.b16 %v373, %v372
  %406 = vmatprep.subr.bf16.mxu0 0
  %407 = vmatpush1.bf16.msra.mxu0 %v374
  %408 = vmatprep.subr.bf16.mxu0 0
  %409 = vmatpush1.bf16.msra.mxu0 %v375
  %410 = vmatprep.subr.bf16.mxu0 0
  %411 = vmatpush1.bf16.msra.mxu0 %v376
  %412 = vmatprep.subr.bf16.mxu0 0
  %413 = vmatpush1.bf16.msra.mxu0 %v377
  %414 = vmatprep.subr.bf16.mxu0 0
  %415 = vmatpush1.bf16.msra.mxu0 %v378
  %416 = vmatprep.subr.bf16.mxu0 0
  %417 = vmatpush1.bf16.msra.mxu0 %v379
  %418 = vmatprep.subr.bf16.mxu0 0
  %419 = vmatpush1.bf16.msra.mxu0 %v380
  %420 = vmatprep.subr.bf16.mxu0 0
  %421 = vmatpush1.bf16.msra.mxu0 %v381
  %422 = vmatprep.subr.bf16.mxu0 0
  %423 = vmatpush1.bf16.msra.mxu0 %v382
  %424 = vmatprep.subr.bf16.mxu0 0
  %425 = vmatpush1.bf16.msra.mxu0 %v383
  %426 = vmatprep.subr.bf16.mxu0 0
  %427 = vmatpush1.bf16.msra.mxu0 %v384
  %428 = vmatprep.subr.bf16.mxu0 0
  %429 = vmatpush1.bf16.msra.mxu0 %v385
  %430 = vmatprep.subr.bf16.mxu0 0
  %431 = vmatpush1.bf16.msra.mxu0 %v386
  %432 = vmatprep.subr.bf16.mxu0 0
  %433 = vmatpush1.bf16.msra.mxu0 %v387
  %434 = vmatprep.subr.bf16.mxu0 0
  %435 = vmatpush1.bf16.msra.mxu0 %v388
  %436 = vmatprep.subr.bf16.mxu0 0
  %437 = vmatpush1.bf16.msra.mxu0 %v389
  %438 = vmatprep.mubr.bf16.mxu0 %v247
  %439 = vmatmul.mubr.bf16.gmra.mrb[0].mxu0 %v246
  %v440 = vpop.f32.mrb[0].mxu0
  %v441 = vadd.f32 0.0, %v440
  %v442 = vpop.f32.mrb[0].mxu0
  %v443 = vpop.f32.mrb[0].mxu0
  %v444 = vadd.f32 0.0, %v443
  %v445 = vpop.f32.mrb[0].mxu0
  %446 = vmatprep.mubr.bf16.mxu0 %v249
  %447 = vmatmul.mubr.bf16.gmra.mrb[0].mxu0 %v248
  %v448 = vpop.f32.mrb[0].mxu0
  %v449 = vadd.f32 0.0, %v448
  %v450 = vpop.f32.mrb[0].mxu0
  %v451 = vpop.f32.mrb[0].mxu0
  %v452 = vadd.f32 0.0, %v451
  %v453 = vpop.f32.mrb[0].mxu0
  %454 = vmatprep.mubr.bf16.mxu0 %v251
  %455 = vmatmul.mubr.bf16.gmra.mrb[0].mxu0 %v250
  %v456 = vpop.f32.mrb[0].mxu0
  %v457 = vadd.f32 0.0, %v456
  %v458 = vpop.f32.mrb[0].mxu0
  %v459 = vpop.f32.mrb[0].mxu0
  %v460 = vadd.f32 0.0, %v459
  %v461 = vpop.f32.mrb[0].mxu0
  %462 = vmatprep.mubr.bf16.mxu0 %v253
  %463 = vmatmul.mubr.bf16.gmra.mrb[0].mxu0 %v252
  %v464 = vpop.f32.mrb[0].mxu0
  %v465 = vadd.f32 0.0, %v464
  %v466 = vpop.f32.mrb[0].mxu0
  %v467 = vpop.f32.mrb[0].mxu0
  %v468 = vadd.f32 0.0, %v467
  %v469 = vpop.f32.mrb[0].mxu0
  %470 = vmatprep.mubr.bf16.mxu0 %v255
  %471 = vmatmul.mubr.bf16.gmra.mrb[0].mxu0 %v254
  %v472 = vpop.f32.mrb[0].mxu0
  %v473 = vadd.f32 0.0, %v472
  %v474 = vpop.f32.mrb[0].mxu0
  %v475 = vpop.f32.mrb[0].mxu0
  %v476 = vadd.f32 0.0, %v475
  %v477 = vpop.f32.mrb[0].mxu0
  %478 = vmatprep.mubr.bf16.mxu0 %v257
  %479 = vmatmul.mubr.bf16.gmra.mrb[0].mxu0 %v256
  %v480 = vpop.f32.mrb[0].mxu0
  %v481 = vadd.f32 0.0, %v480
  %v482 = vpop.f32.mrb[0].mxu0
  %v483 = vpop.f32.mrb[0].mxu0
  %v484 = vadd.f32 0.0, %v483
  %v485 = vpop.f32.mrb[0].mxu0
  %486 = vmatprep.mubr.bf16.mxu0 %v259
  %487 = vmatmul.mubr.bf16.gmra.mrb[0].mxu0 %v258
  %v488 = vpop.f32.mrb[0].mxu0
  %v489 = vadd.f32 0.0, %v488
  %v490 = vpop.f32.mrb[0].mxu0
  %v491 = vpop.f32.mrb[0].mxu0
  %v492 = vadd.f32 0.0, %v491
  %v493 = vpop.f32.mrb[0].mxu0
  %494 = vmatprep.mubr.bf16.mxu0 %v261
  %495 = vmatmul.mubr.bf16.gmra.mrb[0].mxu0 %v260
  %v496 = vpop.f32.mrb[0].mxu0
  %v497 = vadd.f32 0.0, %v496
  %v498 = vpop.f32.mrb[0].mxu0
  %v499 = vpop.f32.mrb[0].mxu0
  %v500 = vadd.f32 0.0, %v499
  %v501 = vpop.f32.mrb[0].mxu0
  %502 = vmatprep.mubr.bf16.mxu0 %v263
  %503 = vmatmul.mubr.bf16.gmra.mrb[0].mxu0 %v262
  %v504 = vpop.f32.mrb[0].mxu0
  %v505 = vadd.f32 0.0, %v504
  %v506 = vpop.f32.mrb[0].mxu0
  %v507 = vpop.f32.mrb[0].mxu0
  %v508 = vadd.f32 0.0, %v507
  %v509 = vpop.f32.mrb[0].mxu0
  %510 = vmatprep.mubr.bf16.mxu0 %v265
  %511 = vmatmul.mubr.bf16.gmra.mrb[0].mxu0 %v264
  %v512 = vpop.f32.mrb[0].mxu0
  %v513 = vadd.f32 0.0, %v512
  %v514 = vpop.f32.mrb[0].mxu0
  %v515 = vpop.f32.mrb[0].mxu0
  %v516 = vadd.f32 0.0, %v515
  %v517 = vpop.f32.mrb[0].mxu0
  %518 = vmatprep.mubr.bf16.mxu0 %v267
  %519 = vmatmul.mubr.bf16.gmra.mrb[0].mxu0 %v266
  %v520 = vpop.f32.mrb[0].mxu0
  %v521 = vadd.f32 0.0, %v520
  %v522 = vpop.f32.mrb[0].mxu0
  %v523 = vpop.f32.mrb[0].mxu0
  %v524 = vadd.f32 0.0, %v523
  %v525 = vpop.f32.mrb[0].mxu0
  %526 = vmatprep.mubr.bf16.mxu0 %v269
  %527 = vmatmul.mubr.bf16.gmra.mrb[0].mxu0 %v268
  %v528 = vpop.f32.mrb[0].mxu0
  %v529 = vadd.f32 0.0, %v528
  %v530 = vpop.f32.mrb[0].mxu0
  %v531 = vpop.f32.mrb[0].mxu0
  %v532 = vadd.f32 0.0, %v531
  %v533 = vpop.f32.mrb[0].mxu0
  %534 = vmatprep.mubr.bf16.mxu0 %v271
  %535 = vmatmul.mubr.bf16.gmra.mrb[0].mxu0 %v270
  %v536 = vpop.f32.mrb[0].mxu0
  %v537 = vadd.f32 0.0, %v536
  %v538 = vpop.f32.mrb[0].mxu0
  %v539 = vpop.f32.mrb[0].mxu0
  %v540 = vadd.f32 0.0, %v539
  %v541 = vpop.f32.mrb[0].mxu0
  %542 = vmatprep.mubr.bf16.mxu0 %v273
  %543 = vmatmul.mubr.bf16.gmra.mrb[0].mxu0 %v272
  %v544 = vpop.f32.mrb[0].mxu0
  %v545 = vadd.f32 0.0, %v544
  %v546 = vpop.f32.mrb[0].mxu0
  %v547 = vpop.f32.mrb[0].mxu0
  %v548 = vadd.f32 0.0, %v547
  %v549 = vpop.f32.mrb[0].mxu0
  %550 = vmatprep.mubr.bf16.mxu0 %v275
  %551 = vmatmul.mubr.bf16.gmra.mrb[0].mxu0 %v274
  %v552 = vpop.f32.mrb[0].mxu0
  %v553 = vadd.f32 0.0, %v552
  %v554 = vpop.f32.mrb[0].mxu0
  %v555 = vpop.f32.mrb[0].mxu0
  %v556 = vadd.f32 0.0, %v555
  %v557 = vpop.f32.mrb[0].mxu0
  %558 = vmatprep.mubr.bf16.mxu0 %v277
  %559 = vmatmul.mubr.bf16.gmra.mrb[0].mxu0 %v276
  %v560 = vpop.f32.mrb[0].mxu0
  %v561 = vadd.f32 0.0, %v560
  %v562 = vpop.f32.mrb[0].mxu0
  %v563 = vpop.f32.mrb[0].mxu0
  %v564 = vadd.f32 0.0, %v563
  %v565 = vpop.f32.mrb[0].mxu0
  %566 = vdwg.mxu0
  %v567 = vadd.f32 %v54, %v441
  %v568 = vadd.f32 %v55, %v444
  %v569 = vadd.f32 %v56, %v449
  %v570 = vadd.f32 %v57, %v452
  %v571 = vadd.f32 %v58, %v457
  %v572 = vadd.f32 %v59, %v460
  %v573 = vadd.f32 %v60, %v465
  %v574 = vadd.f32 %v61, %v468
  %v575 = vadd.f32 %v62, %v473
  %v576 = vadd.f32 %v63, %v476
  %v577 = vadd.f32 %v64, %v481
  %v578 = vadd.f32 %v65, %v484
  %v579 = vadd.f32 %v66, %v489
  %v580 = vadd.f32 %v67, %v492
  %v581 = vadd.f32 %v68, %v497
  %v582 = vadd.f32 %v69, %v500
  %v583 = vadd.f32 %v70, %v505
  %v584 = vadd.f32 %v71, %v508
  %v585 = vadd.f32 %v72, %v513
  %v586 = vadd.f32 %v73, %v516
  %v587 = vadd.f32 %v74, %v521
  %v588 = vadd.f32 %v75, %v524
  %v589 = vadd.f32 %v76, %v529
  %v590 = vadd.f32 %v77, %v532
  %v591 = vadd.f32 %v78, %v537
  %v592 = vadd.f32 %v79, %v540
  %v593 = vadd.f32 %v80, %v545
  %v594 = vadd.f32 %v81, %v548
  %v595 = vadd.f32 %v82, %v553
  %v596 = vadd.f32 %v83, %v556
  %v597 = vadd.f32 %v84, %v561
  %v598 = vadd.f32 %v85, %v564
  %599 = vst [vmem:[#allocation2] sm:$0xff] %v567
  %600 = vst [vmem:[#allocation2 + $0x8] sm:$0xff] %v568
  %601 = vst [vmem:[#allocation2 + $0x10] sm:$0xff] %v569
  %602 = vst [vmem:[#allocation2 + $0x18] sm:$0xff] %v570
  %603 = vst [vmem:[#allocation2 + $0x20] sm:$0xff] %v571
  %604 = vst [vmem:[#allocation2 + $0x28] sm:$0xff] %v572
  %605 = vst [vmem:[#allocation2 + $0x30] sm:$0xff] %v573
  %606 = vst [vmem:[#allocation2 + $0x38] sm:$0xff] %v574
  %607 = vst [vmem:[#allocation2 + $0x40] sm:$0xff] %v575
  %608 = vst [vmem:[#allocation2 + $0x48] sm:$0xff] %v576
  %609 = vst [vmem:[#allocation2 + $0x50] sm:$0xff] %v577
  %610 = vst [vmem:[#allocation2 + $0x58] sm:$0xff] %v578
  %611 = vst [vmem:[#allocation2 + $0x60] sm:$0xff] %v579
  %612 = vst [vmem:[#allocation2 + $0x68] sm:$0xff] %v580
  %613 = vst [vmem:[#allocation2 + $0x70] sm:$0xff] %v581
  %614 = vst [vmem:[#allocation2 + $0x78] sm:$0xff] %v582
  %615 = vst [vmem:[#allocation2 + $0x80] sm:$0xff] %v583
  %616 = vst [vmem:[#allocation2 + $0x88] sm:$0xff] %v584
  %617 = vst [vmem:[#allocation2 + $0x90] sm:$0xff] %v585
  %618 = vst [vmem:[#allocation2 + $0x98] sm:$0xff] %v586
  %619 = vst [vmem:[#allocation2 + $0xa0] sm:$0xff] %v587
  %620 = vst [vmem:[#allocation2 + $0xa8] sm:$0xff] %v588
  %621 = vst [vmem:[#allocation2 + $0xb0] sm:$0xff] %v589
  %622 = vst [vmem:[#allocation2 + $0xb8] sm:$0xff] %v590
  %623 = vst [vmem:[#allocation2 + $0xc0] sm:$0xff] %v591
  %624 = vst [vmem:[#allocation2 + $0xc8] sm:$0xff] %v592
  %625 = vst [vmem:[#allocation2 + $0xd0] sm:$0xff] %v593
  %626 = vst [vmem:[#allocation2 + $0xd8] sm:$0xff] %v594
  %627 = vst [vmem:[#allocation2 + $0xe0] sm:$0xff] %v595
  %628 = vst [vmem:[#allocation2 + $0xe8] sm:$0xff] %v596
  %629 = vst [vmem:[#allocation2 + $0xf0] sm:$0xff] %v597
  %630 = vst [vmem:[#allocation2 + $0xf8] sm:$0xff] %v598
  // Predicated region
  $region22: #{contrastive_gnn_forward.3} parent=0 // pred_check
    %p631 = pneg %p18
  $region23: #{contrastive_gnn_forward.3} parent=0 // pred_check_branch
    %633 = sbr.rel (%p631) target = $region25
  $region24: #{contrastive_gnn_forward.3} parent=0 // pred_region
    %v634 = vld [vmem:[#allocation2] sm:$0xff]
    %v635 = vld [vmem:[#allocation2 + $0x8] sm:$0xff]
    %v636 = vld [vmem:[#allocation2 + $0x10] sm:$0xff]
    %v637 = vld [vmem:[#allocation2 + $0x18] sm:$0xff]
    %v638 = vld [vmem:[#allocation2 + $0x20] sm:$0xff]
    %v639 = vld [vmem:[#allocation2 + $0x28] sm:$0xff]
    %v640 = vld [vmem:[#allocation2 + $0x30] sm:$0xff]
    %v641 = vld [vmem:[#allocation2 + $0x38] sm:$0xff]
    %v642 = vld [vmem:[#allocation2 + $0x40] sm:$0xff]
    %v643 = vld [vmem:[#allocation2 + $0x48] sm:$0xff]
    %v644 = vld [vmem:[#allocation2 + $0x50] sm:$0xff]
    %v645 = vld [vmem:[#allocation2 + $0x58] sm:$0xff]
    %v646 = vld [vmem:[#allocation2 + $0x60] sm:$0xff]
    %v647 = vld [vmem:[#allocation2 + $0x68] sm:$0xff]
    %v648 = vld [vmem:[#allocation2 + $0x70] sm:$0xff]
    %v649 = vld [vmem:[#allocation2 + $0x78] sm:$0xff]
    %v650 = vld [vmem:[#allocation2 + $0x80] sm:$0xff]
    %v651 = vld [vmem:[#allocation2 + $0x88] sm:$0xff]
    %v652 = vld [vmem:[#allocation2 + $0x90] sm:$0xff]
    %v653 = vld [vmem:[#allocation2 + $0x98] sm:$0xff]
    %v654 = vld [vmem:[#allocation2 + $0xa0] sm:$0xff]
    %v655 = vld [vmem:[#allocation2 + $0xa8] sm:$0xff]
    %v656 = vld [vmem:[#allocation2 + $0xb0] sm:$0xff]
    %v657 = vld [vmem:[#allocation2 + $0xb8] sm:$0xff]
    %v658 = vld [vmem:[#allocation2 + $0xc0] sm:$0xff]
    %v659 = vld [vmem:[#allocation2 + $0xc8] sm:$0xff]
    %v660 = vld [vmem:[#allocation2 + $0xd0] sm:$0xff]
    %v661 = vld [vmem:[#allocation2 + $0xd8] sm:$0xff]
    %v662 = vld [vmem:[#allocation2 + $0xe0] sm:$0xff]
    %v663 = vld [vmem:[#allocation2 + $0xe8] sm:$0xff]
    %v664 = vld [vmem:[#allocation2 + $0xf0] sm:$0xff]
    %v665 = vld [vmem:[#allocation2 + $0xf8] sm:$0xff]
    %v666 = vpack.c.bf16 %v635, %v634
    %v667 = vpack.c.bf16 %v637, %v636
    %v668 = vpack.c.bf16 %v639, %v638
    %v669 = vpack.c.bf16 %v641, %v640
    %v670 = vpack.c.bf16 %v643, %v642
    %v671 = vpack.c.bf16 %v645, %v644
    %v672 = vpack.c.bf16 %v647, %v646
    %v673 = vpack.c.bf16 %v649, %v648
    %v674 = vpack.c.bf16 %v651, %v650
    %v675 = vpack.c.bf16 %v653, %v652
    %v676 = vpack.c.bf16 %v655, %v654
    %v677 = vpack.c.bf16 %v657, %v656
    %v678 = vpack.c.bf16 %v659, %v658
    %v679 = vpack.c.bf16 %v661, %v660
    %v680 = vpack.c.bf16 %v663, %v662
    %v681 = vpack.c.bf16 %v665, %v664
    %v682 = vld [vmem:[%s2] sm:$0xf]
    %v683 = vld [vmem:[%s2 + $0x4] sm:$0xf]
    %v684 = vld [vmem:[%s2 + $0x8] sm:$0xf]
    %v685 = vld [vmem:[%s2 + $0xc] sm:$0xf]
    %v686 = vld [vmem:[%s2 + $0x10] sm:$0xf]
    %v687 = vld [vmem:[%s2 + $0x14] sm:$0xf]
    %v688 = vld [vmem:[%s2 + $0x18] sm:$0xf]
    %v689 = vld [vmem:[%s2 + $0x1c] sm:$0xf]
    %v690 = vld [vmem:[%s2 + $0x20] sm:$0xf]
    %v691 = vld [vmem:[%s2 + $0x24] sm:$0xf]
    %v692 = vld [vmem:[%s2 + $0x28] sm:$0xf]
    %v693 = vld [vmem:[%s2 + $0x2c] sm:$0xf]
    %v694 = vld [vmem:[%s2 + $0x30] sm:$0xf]
    %v695 = vld [vmem:[%s2 + $0x34] sm:$0xf]
    %v696 = vld [vmem:[%s2 + $0x38] sm:$0xf]
    %v697 = vld [vmem:[%s2 + $0x3c] sm:$0xf]
    %v698 = vld [vmem:[%s3] sm:$0x1]
    %v700 = vlaneseq
    %v701 = vshrl.u32 %v700, 7
    %v702 = vsub.s32 0, %v701
    %v703 = vrot.slane %v698, %v702
    %v721 = vunpack.c.l.b16 %v682
    %v722 = vunpack.c.l.b16 %v683
    %v723 = vunpack.c.l.b16 %v684
    %v724 = vunpack.c.l.b16 %v685
    %v725 = vunpack.c.l.b16 %v686
    %v726 = vunpack.c.l.b16 %v687
    %v727 = vunpack.c.l.b16 %v688
    %v728 = vunpack.c.l.b16 %v689
    %v729 = vunpack.c.l.b16 %v690
    %v730 = vunpack.c.l.b16 %v691
    %v731 = vunpack.c.l.b16 %v692
    %v732 = vunpack.c.l.b16 %v693
    %v733 = vunpack.c.l.b16 %v694
    %v734 = vunpack.c.l.b16 %v695
    %v735 = vunpack.c.l.b16 %v696
    %v736 = vunpack.c.l.b16 %v697
    %v737 = vpack.c.b16 %v722, %v721
    %v738 = vpack.c.b16 %v724, %v723
    %v739 = vpack.c.b16 %v726, %v725
    %v740 = vpack.c.b16 %v728, %v727
    %v741 = vpack.c.b16 %v730, %v729
    %v742 = vpack.c.b16 %v732, %v731
    %v743 = vpack.c.b16 %v734, %v733
    %v744 = vpack.c.b16 %v736, %v735
    %753 = vmatprep.subr.bf16.mxu0 0
    %754 = vmatpush1.bf16.msra.mxu0 %v737
    %755 = vmatprep.subr.bf16.mxu0 0
    %756 = vmatpush1.bf16.msra.mxu0 %v738
    %757 = vmatprep.subr.bf16.mxu0 0
    %758 = vmatpush1.bf16.msra.mxu0 %v739
    %759 = vmatprep.subr.bf16.mxu0 0
    %760 = vmatpush1.bf16.msra.mxu0 %v740
    %761 = vmatprep.subr.bf16.mxu0 0
    %762 = vmatpush1.bf16.msra.mxu0 %v741
    %763 = vmatprep.subr.bf16.mxu0 0
    %764 = vmatpush1.bf16.msra.mxu0 %v742
    %765 = vmatprep.subr.bf16.mxu0 0
    %766 = vmatpush1.bf16.msra.mxu0 %v743
    %767 = vmatprep.subr.bf16.mxu0 0
    %768 = vmatpush1.bf16.msra.mxu0 %v744
    %769 = vmatprep.subr.bf16.mxu0 0
    %770 = vmatpush1.bf16.msra.mxu0 0
    %771 = vmatprep.subr.bf16.mxu0 0
    %772 = vmatpush1.bf16.msra.mxu0 0
    %773 = vmatprep.subr.bf16.mxu0 0
    %774 = vmatpush1.bf16.msra.mxu0 0
    %775 = vmatprep.subr.bf16.mxu0 0
    %776 = vmatpush1.bf16.msra.mxu0 0
    %777 = vmatprep.subr.bf16.mxu0 0
    %778 = vmatpush1.bf16.msra.mxu0 0
    %779 = vmatprep.subr.bf16.mxu0 0
    %780 = vmatpush1.bf16.msra.mxu0 0
    %781 = vmatprep.subr.bf16.mxu0 0
    %782 = vmatpush1.bf16.msra.mxu0 0
    %783 = vmatprep.subr.bf16.mxu0 0
    %784 = vmatpush1.bf16.msra.mxu0 0
    %785 = vmatprep.mubr.bf16.mxu0 0
    %786 = vmatmul.mubr.bf16.gmra.mrb[0].mxu0 %v666
    %v787 = vpop.f32.mrb[0].mxu0
    %v788 = vadd.f32 %v703, %v787
    %v789 = vpop.f32.mrb[0].mxu0
    %v790 = vpop.f32.mrb[0].mxu0
    %v791 = vadd.f32 %v703, %v790
    %v792 = vpop.f32.mrb[0].mxu0
    %793 = vmatprep.mubr.bf16.mxu0 0
    %794 = vmatmul.mubr.bf16.gmra.mrb[0].mxu0 %v667
    %v795 = vpop.f32.mrb[0].mxu0
    %v796 = vadd.f32 %v703, %v795
    %v797 = vpop.f32.mrb[0].mxu0
    %v798 = vpop.f32.mrb[0].mxu0
    %v799 = vadd.f32 %v703, %v798
    %v800 = vpop.f32.mrb[0].mxu0
    %801 = vmatprep.mubr.bf16.mxu0 0
    %802 = vmatmul.mubr.bf16.gmra.mrb[0].mxu0 %v668
    %v803 = vpop.f32.mrb[0].mxu0
    %v804 = vadd.f32 %v703, %v803
    %v805 = vpop.f32.mrb[0].mxu0
    %v806 = vpop.f32.mrb[0].mxu0
    %v807 = vadd.f32 %v703, %v806
    %v808 = vpop.f32.mrb[0].mxu0
    %809 = vmatprep.mubr.bf16.mxu0 0
    %810 = vmatmul.mubr.bf16.gmra.mrb[0].mxu0 %v669
    %v811 = vpop.f32.mrb[0].mxu0
    %v812 = vadd.f32 %v703, %v811
    %v813 = vpop.f32.mrb[0].mxu0
    %v814 = vpop.f32.mrb[0].mxu0
    %v815 = vadd.f32 %v703, %v814
    %v816 = vpop.f32.mrb[0].mxu0
    %817 = vmatprep.mubr.bf16.mxu0 0
    %818 = vmatmul.mubr.bf16.gmra.mrb[0].mxu0 %v670
    %v819 = vpop.f32.mrb[0].mxu0
    %v820 = vadd.f32 %v703, %v819
    %v821 = vpop.f32.mrb[0].mxu0
    %v822 = vpop.f32.mrb[0].mxu0
    %v823 = vadd.f32 %v703, %v822
    %v824 = vpop.f32.mrb[0].mxu0
    %825 = vmatprep.mubr.bf16.mxu0 0
    %826 = vmatmul.mubr.bf16.gmra.mrb[0].mxu0 %v671
    %v827 = vpop.f32.mrb[0].mxu0
    %v828 = vadd.f32 %v703, %v827
    %v829 = vpop.f32.mrb[0].mxu0
    %v830 = vpop.f32.mrb[0].mxu0
    %v831 = vadd.f32 %v703, %v830
    %v832 = vpop.f32.mrb[0].mxu0
    %833 = vmatprep.mubr.bf16.mxu0 0
    %834 = vmatmul.mubr.bf16.gmra.mrb[0].mxu0 %v672
    %v835 = vpop.f32.mrb[0].mxu0
    %v836 = vadd.f32 %v703, %v835
    %v837 = vpop.f32.mrb[0].mxu0
    %v838 = vpop.f32.mrb[0].mxu0
    %v839 = vadd.f32 %v703, %v838
    %v840 = vpop.f32.mrb[0].mxu0
    %841 = vmatprep.mubr.bf16.mxu0 0
    %842 = vmatmul.mubr.bf16.gmra.mrb[0].mxu0 %v673
    %v843 = vpop.f32.mrb[0].mxu0
    %v844 = vadd.f32 %v703, %v843
    %v845 = vpop.f32.mrb[0].mxu0
    %v846 = vpop.f32.mrb[0].mxu0
    %v847 = vadd.f32 %v703, %v846
    %v848 = vpop.f32.mrb[0].mxu0
    %849 = vmatprep.mubr.bf16.mxu0 0
    %850 = vmatmul.mubr.bf16.gmra.mrb[0].mxu0 %v674
    %v851 = vpop.f32.mrb[0].mxu0
    %v852 = vadd.f32 %v703, %v851
    %v853 = vpop.f32.mrb[0].mxu0
    %v854 = vpop.f32.mrb[0].mxu0
    %v855 = vadd.f32 %v703, %v854
    %v856 = vpop.f32.mrb[0].mxu0
    %857 = vmatprep.mubr.bf16.mxu0 0
    %858 = vmatmul.mubr.bf16.gmra.mrb[0].mxu0 %v675
    %v859 = vpop.f32.mrb[0].mxu0
    %v860 = vadd.f32 %v703, %v859
    %v861 = vpop.f32.mrb[0].mxu0
    %v862 = vpop.f32.mrb[0].mxu0
    %v863 = vadd.f32 %v703, %v862
    %v864 = vpop.f32.mrb[0].mxu0
    %865 = vmatprep.mubr.bf16.mxu0 0
    %866 = vmatmul.mubr.bf16.gmra.mrb[0].mxu0 %v676
    %v867 = vpop.f32.mrb[0].mxu0
    %v868 = vadd.f32 %v703, %v867
    %v869 = vpop.f32.mrb[0].mxu0
    %v870 = vpop.f32.mrb[0].mxu0
    %v871 = vadd.f32 %v703, %v870
    %v872 = vpop.f32.mrb[0].mxu0
    %873 = vmatprep.mubr.bf16.mxu0 0
    %874 = vmatmul.mubr.bf16.gmra.mrb[0].mxu0 %v677
    %v875 = vpop.f32.mrb[0].mxu0
    %v876 = vadd.f32 %v703, %v875
    %v877 = vpop.f32.mrb[0].mxu0
    %v878 = vpop.f32.mrb[0].mxu0
    %v879 = vadd.f32 %v703, %v878
    %v880 = vpop.f32.mrb[0].mxu0
    %881 = vmatprep.mubr.bf16.mxu0 0
    %882 = vmatmul.mubr.bf16.gmra.mrb[0].mxu0 %v678
    %v883 = vpop.f32.mrb[0].mxu0
    %v884 = vadd.f32 %v703, %v883
    %v885 = vpop.f32.mrb[0].mxu0
    %v886 = vpop.f32.mrb[0].mxu0
    %v887 = vadd.f32 %v703, %v886
    %v888 = vpop.f32.mrb[0].mxu0
    %889 = vmatprep.mubr.bf16.mxu0 0
    %890 = vmatmul.mubr.bf16.gmra.mrb[0].mxu0 %v679
    %v891 = vpop.f32.mrb[0].mxu0
    %v892 = vadd.f32 %v703, %v891
    %v893 = vpop.f32.mrb[0].mxu0
    %v894 = vpop.f32.mrb[0].mxu0
    %v895 = vadd.f32 %v703, %v894
    %v896 = vpop.f32.mrb[0].mxu0
    %897 = vmatprep.mubr.bf16.mxu0 0
    %898 = vmatmul.mubr.bf16.gmra.mrb[0].mxu0 %v680
    %v899 = vpop.f32.mrb[0].mxu0
    %v900 = vadd.f32 %v703, %v899
    %v901 = vpop.f32.mrb[0].mxu0
    %v902 = vpop.f32.mrb[0].mxu0
    %v903 = vadd.f32 %v703, %v902
    %v904 = vpop.f32.mrb[0].mxu0
    %905 = vmatprep.mubr.bf16.mxu0 0
    %906 = vmatmul.mubr.bf16.gmra.mrb[0].mxu0 %v681
    %v907 = vpop.f32.mrb[0].mxu0
    %v908 = vadd.f32 %v703, %v907
    %v909 = vpop.f32.mrb[0].mxu0
    %v910 = vpop.f32.mrb[0].mxu0
    %v911 = vadd.f32 %v703, %v910
    %v912 = vpop.f32.mrb[0].mxu0
    %913 = vdwg.mxu0
    %v914 = vmax.f32 %v788, 0.0
    %v915 = vmax.f32 %v791, 0.0
    %v916 = vmax.f32 %v796, 0.0
    %v917 = vmax.f32 %v799, 0.0
    %v918 = vmax.f32 %v804, 0.0
    %v919 = vmax.f32 %v807, 0.0
    %v920 = vmax.f32 %v812, 0.0
    %v921 = vmax.f32 %v815, 0.0
    %v922 = vmax.f32 %v820, 0.0
    %v923 = vmax.f32 %v823, 0.0
    %v924 = vmax.f32 %v828, 0.0
    %v925 = vmax.f32 %v831, 0.0
    %v926 = vmax.f32 %v836, 0.0
    %v927 = vmax.f32 %v839, 0.0
    %v928 = vmax.f32 %v844, 0.0
    %v929 = vmax.f32 %v847, 0.0
    %v930 = vmax.f32 %v852, 0.0
    %v931 = vmax.f32 %v855, 0.0
    %v932 = vmax.f32 %v860, 0.0
    %v933 = vmax.f32 %v863, 0.0
    %v934 = vmax.f32 %v868, 0.0
    %v935 = vmax.f32 %v871, 0.0
    %v936 = vmax.f32 %v876, 0.0
    %v937 = vmax.f32 %v879, 0.0
    %v938 = vmax.f32 %v884, 0.0
    %v939 = vmax.f32 %v887, 0.0
    %v940 = vmax.f32 %v892, 0.0
    %v941 = vmax.f32 %v895, 0.0
    %v942 = vmax.f32 %v900, 0.0
    %v943 = vmax.f32 %v903, 0.0
    %v944 = vmax.f32 %v908, 0.0
    %v945 = vmax.f32 %v911, 0.0
    %v946 = vpack.c.bf16 %v915, %v914
    %v947 = vpack.c.bf16 %v917, %v916
    %v948 = vpack.c.bf16 %v919, %v918
    %v949 = vpack.c.bf16 %v921, %v920
    %v950 = vpack.c.bf16 %v923, %v922
    %v951 = vpack.c.bf16 %v925, %v924
    %v952 = vpack.c.bf16 %v927, %v926
    %v953 = vpack.c.bf16 %v929, %v928
    %v954 = vpack.c.bf16 %v931, %v930
    %v955 = vpack.c.bf16 %v933, %v932
    %v956 = vpack.c.bf16 %v935, %v934
    %v957 = vpack.c.bf16 %v937, %v936
    %v958 = vpack.c.bf16 %v939, %v938
    %v959 = vpack.c.bf16 %v941, %v940
    %v960 = vpack.c.bf16 %v943, %v942
    %v961 = vpack.c.bf16 %v945, %v944
    %v978 = vunpack.c.l.b16 %v946
    %v979 = vunpack.c.h.b16 %v946
    %v980 = vunpack.c.l.b16 %v947
    %v981 = vunpack.c.h.b16 %v947
    %v982 = vunpack.c.l.b16 %v948
    %v983 = vunpack.c.h.b16 %v948
    %v984 = vunpack.c.l.b16 %v949
    %v985 = vunpack.c.h.b16 %v949
    %v986 = vunpack.c.l.b16 %v950
    %v987 = vunpack.c.h.b16 %v950
    %v988 = vunpack.c.l.b16 %v951
    %v989 = vunpack.c.h.b16 %v951
    %v990 = vunpack.c.l.b16 %v952
    %v991 = vunpack.c.h.b16 %v952
    %v992 = vunpack.c.l.b16 %v953
    %v993 = vunpack.c.h.b16 %v953
    %v994 = vunpack.c.l.b16 %v954
    %v995 = vunpack.c.h.b16 %v954
    %v996 = vunpack.c.l.b16 %v955
    %v997 = vunpack.c.h.b16 %v955
    %v998 = vunpack.c.l.b16 %v956
    %v999 = vunpack.c.h.b16 %v956
    %v1000 = vunpack.c.l.b16 %v957
    %v1001 = vunpack.c.h.b16 %v957
    %v1002 = vunpack.c.l.b16 %v958
    %v1003 = vunpack.c.h.b16 %v958
    %v1004 = vunpack.c.l.b16 %v959
    %v1005 = vunpack.c.h.b16 %v959
    %v1006 = vunpack.c.l.b16 %v960
    %v1007 = vunpack.c.h.b16 %v960
    %v1008 = vunpack.c.l.b16 %v961
    %v1009 = vunpack.c.h.b16 %v961
    %v1010 = vpack.c.b16 %v978, %v978
    %v1011 = vpack.c.b16 %v979, %v979
    %v1012 = vpack.c.b16 %v980, %v980
    %v1013 = vpack.c.b16 %v981, %v981
    %v1014 = vpack.c.b16 %v982, %v982
    %v1015 = vpack.c.b16 %v983, %v983
    %v1016 = vpack.c.b16 %v984, %v984
    %v1017 = vpack.c.b16 %v985, %v985
    %v1018 = vpack.c.b16 %v986, %v986
    %v1019 = vpack.c.b16 %v987, %v987
    %v1020 = vpack.c.b16 %v988, %v988
    %v1021 = vpack.c.b16 %v989, %v989
    %v1022 = vpack.c.b16 %v990, %v990
    %v1023 = vpack.c.b16 %v991, %v991
    %v1024 = vpack.c.b16 %v992, %v992
    %v1025 = vpack.c.b16 %v993, %v993
    %v1026 = vpack.c.b16 %v994, %v994
    %v1027 = vpack.c.b16 %v995, %v995
    %v1028 = vpack.c.b16 %v996, %v996
    %v1029 = vpack.c.b16 %v997, %v997
    %v1030 = vpack.c.b16 %v998, %v998
    %v1031 = vpack.c.b16 %v999, %v999
    %v1032 = vpack.c.b16 %v1000, %v1000
    %v1033 = vpack.c.b16 %v1001, %v1001
    %v1034 = vpack.c.b16 %v1002, %v1002
    %v1035 = vpack.c.b16 %v1003, %v1003
    %v1036 = vpack.c.b16 %v1004, %v1004
    %v1037 = vpack.c.b16 %v1005, %v1005
    %v1038 = vpack.c.b16 %v1006, %v1006
    %v1039 = vpack.c.b16 %v1007, %v1007
    %v1040 = vpack.c.b16 %v1008, %v1008
    %v1041 = vpack.c.b16 %v1009, %v1009
    %1074 = vst [vmem:[%s4] sm:$0xf] %v1010
    %1075 = vst [vmem:[%s4 + $0x4] sm:$0xf] %v1011
    %1076 = vst [vmem:[%s4 + $0x8] sm:$0xf] %v1012
    %1077 = vst [vmem:[%s4 + $0xc] sm:$0xf] %v1013
    %1078 = vst [vmem:[%s4 + $0x10] sm:$0xf] %v1014
    %1079 = vst [vmem:[%s4 + $0x14] sm:$0xf] %v1015
    %1080 = vst [vmem:[%s4 + $0x18] sm:$0xf] %v1016
    %1081 = vst [vmem:[%s4 + $0x1c] sm:$0xf] %v1017
    %1082 = vst [vmem:[%s4 + $0x20] sm:$0xf] %v1018
    %1083 = vst [vmem:[%s4 + $0x24] sm:$0xf] %v1019
    %1084 = vst [vmem:[%s4 + $0x28] sm:$0xf] %v1020
    %1085 = vst [vmem:[%s4 + $0x2c] sm:$0xf] %v1021
    %1086 = vst [vmem:[%s4 + $0x30] sm:$0xf] %v1022
    %1087 = vst [vmem:[%s4 + $0x34] sm:$0xf] %v1023
    %1088 = vst [vmem:[%s4 + $0x38] sm:$0xf] %v1024
    %1089 = vst [vmem:[%s4 + $0x3c] sm:$0xf] %v1025
    %1090 = vst [vmem:[%s4 + $0x40] sm:$0xf] %v1026
    %1091 = vst [vmem:[%s4 + $0x44] sm:$0xf] %v1027
    %1092 = vst [vmem:[%s4 + $0x48] sm:$0xf] %v1028
    %1093 = vst [vmem:[%s4 + $0x4c] sm:$0xf] %v1029
    %1094 = vst [vmem:[%s4 + $0x50] sm:$0xf] %v1030
    %1095 = vst [vmem:[%s4 + $0x54] sm:$0xf] %v1031
    %1096 = vst [vmem:[%s4 + $0x58] sm:$0xf] %v1032
    %1097 = vst [vmem:[%s4 + $0x5c] sm:$0xf] %v1033
    %1098 = vst [vmem:[%s4 + $0x60] sm:$0xf] %v1034
    %1099 = vst [vmem:[%s4 + $0x64] sm:$0xf] %v1035
    %1100 = vst [vmem:[%s4 + $0x68] sm:$0xf] %v1036
    %1101 = vst [vmem:[%s4 + $0x6c] sm:$0xf] %v1037
    %1102 = vst [vmem:[%s4 + $0x70] sm:$0xf] %v1038
    %1103 = vst [vmem:[%s4 + $0x74] sm:$0xf] %v1039
    %1104 = vst [vmem:[%s4 + $0x78] sm:$0xf] %v1040
    %1105 = vst [vmem:[%s4 + $0x7c] sm:$0xf] %v1041
  $region25: #{contrastive_gnn_forward.3} parent=0 // pred_fallthru
    _
  // Predicated region
  $region26: #{contrastive_gnn_forward.3} parent=0 // pred_check
    _
  $region27: #{contrastive_gnn_forward.3} parent=0 // pred_check_branch
    %1107 = sbr.rel (0) target = $region29
  $region28: #{contrastive_gnn_forward.3} parent=0 // pred_region
    _
  $region29: #{contrastive_gnn_forward.3} parent=0 // pred_fallthru
    _
  // Predicated region
  $region30: #{contrastive_gnn_forward.3} parent=0 // pred_check
    _
  $region31: #{contrastive_gnn_forward.3} parent=0 // pred_check_branch
    %1109 = sbr.rel (0) target = $region33
  $region32: #{contrastive_gnn_forward.3} parent=0 // pred_region
    _
  $region33: #{contrastive_gnn_forward.3} parent=0 // pred_fallthru
    _

</llo_original>
